<compile_context>
chip_gen: v7x
topology: tpu7x:2x2x1
jax: 0.10.0
libtpu: 0.0.40
codegen_flags: <defaults>
</compile_context>

<pallas_src>
import functools
import math

import jax
import jax.numpy as jnp
from jax.experimental import pallas as pl
from jax.experimental.pallas import tpu as pltpu


def _mha_ln_kernel(x_ref, wq_ref, wk_ref, wv_ref, wo_ref,
                   bq_ref, bk_ref, bv_ref, bo_ref,
                   g1_ref, b1_ref, g2_ref, b2_ref,
                   o_ref, *, num_heads, eps=1e-5):
    """One batch element per grid step.

    x_ref               : (L, E) f32   (batch dim squeezed by the BlockSpec)
    wq/wk/wv/wo_ref     : (E, E) bf16  pre-transposed; wq/bq carry 1/sqrt(hd)
    biases / LN params  : (1, E) f32
    o_ref               : (L, E) f32
    """
    L, E = x_ref.shape
    hd = E // num_heads

    x = x_ref[...]                               # (L, E) f32, kept for residual
    xb = x.astype(jnp.bfloat16)

    # ---- Q/K/V projections: bf16 MXU operands, f32 accumulation -------------
    q = jnp.dot(xb, wq_ref[...], preferred_element_type=jnp.float32) + bq_ref[...]
    k = jnp.dot(xb, wk_ref[...], preferred_element_type=jnp.float32) + bk_ref[...]
    v = jnp.dot(xb, wv_ref[...], preferred_element_type=jnp.float32) + bv_ref[...]

    # Hoisted bf16 casts (once, not per head).
    qb = q.astype(jnp.bfloat16)                  # (L, E)
    kb = k.astype(jnp.bfloat16)                  # (L, E)
    vb = v.astype(jnp.bfloat16)                  # (L, E)

    # ---- per-head attention: hd-wide contractions ----------------------------
    # num_heads is small & static; per-head live set is only (L, L) + (L, hd),
    # so a static Python loop does not create large cross-iteration live ranges.
    head_outs = []
    for h in range(num_heads):
        lo = h * hd
        hi = lo + hd
        qh = qb[:, lo:hi]                        # (L, hd) bf16 (scale already folded in)
        kh = kb[:, lo:hi]                        # (L, hd) bf16
        vh = vb[:, lo:hi]                        # (L, hd) bf16

        # Contraction over the last (hd) dim of both operands; only this head's
        # (L, hd) K slice gets relaid out -> one full-K transpose total.
        s = jnp.einsum('qd,kd->qk', qh, kh,
                       preferred_element_type=jnp.float32)        # (L, L) f32
        s = s - jnp.max(s, axis=-1, keepdims=True)
        p = jnp.exp(s)                                            # un-normalized probs
        denom = jnp.sum(p, axis=-1, keepdims=True)                # (L, 1)

        oh = jnp.dot(p.astype(jnp.bfloat16), vh,
                     preferred_element_type=jnp.float32)          # (L, hd) f32
        # Deferred softmax normalization on the narrow (L, hd) output rows.
        head_outs.append(oh * pl.reciprocal(denom, approx=True))
    attn = jnp.concatenate(head_outs, axis=-1)                    # (L, E) f32

    # ---- output projection + residual ----------------------------------------
    out = jnp.dot(attn.astype(jnp.bfloat16), wo_ref[...],
                  preferred_element_type=jnp.float32) + bo_ref[...]

    # TODO(synk): nn.Dropout(0.1) is identity in eval mode; training-mode RNG
    # dropout is not implemented here.
    y = x + out

    # ---- LayerNorm 1 (biased variance, eps=1e-5, matches torch.nn.LayerNorm) -
    mu = jnp.mean(y, axis=-1, keepdims=True)
    var = jnp.mean((y - mu) ** 2, axis=-1, keepdims=True)
    y = (y - mu) * jax.lax.rsqrt(var + eps) * g1_ref[...] + b1_ref[...]

    # ---- LayerNorm 2 ----------------------------------------------------------
    mu = jnp.mean(y, axis=-1, keepdims=True)
    var = jnp.mean((y - mu) ** 2, axis=-1, keepdims=True)
    y = (y - mu) * jax.lax.rsqrt(var + eps) * g2_ref[...] + b2_ref[...]

    o_ref[...] = y


def _vmem_limit_bytes(L, E):
    """Working-set estimate (with headroom), clamped to a safe range."""
    f32, bf16 = 4, 2
    per_step = (
        2 * 2 * L * E * f32          # x / out blocks, double-buffered
        + 4 * E * E * bf16           # wq, wk, wv, wo (resident)
        + 9 * E * f32                # biases + LN params
        + 10 * L * E * f32           # q, k, v (+bf16 copies), attn, y
        + 3 * L * L * f32            # per-head score / prob tiles
    )
    return int(min(48 * 1024 * 1024, max(8 * 1024 * 1024, 6 * per_step)))


def self_attention_layer(x_lne, kparams, *, num_heads):
    """x_lne: (L, N, E) float32 (PyTorch seq-first layout). Returns (L, N, E)."""
    L, N, E = x_lne.shape
    assert E % num_heads == 0, "embed_dim must be divisible by num_heads"

    # Seq-first -> batch-first so the "parallel" batch grid axis is the LEADING
    # block dim; the last two block dims then equal the full array dims, which
    # keeps the (8, 128) BlockSpec rule trivially satisfied.
    # TODO(synk): at realistic L, replace this transpose + the monolithic
    # per-batch body with flash-style (query-tile, kv-tile) tiling that reads
    # the (L, N, E) layout directly.
    x_nle = jnp.transpose(x_lne, (1, 0, 2))

    kernel = functools.partial(_mha_ln_kernel, num_heads=num_heads)

    resident = lambda n: (0, 0)      # weights / biases: same block every step
    per_batch = lambda n: (n, 0, 0)  # per-batch (L, E) tile

    out_nle = pl.pallas_call(
        kernel,
        out_shape=jax.ShapeDtypeStruct((N, L, E), jnp.float32),
        grid_spec=pltpu.PrefetchScalarGridSpec(
            num_scalar_prefetch=0,
            grid=(N,),
            in_specs=[
                pl.BlockSpec((None, L, E), per_batch),   # x  (batch dim squeezed)
                pl.BlockSpec((E, E), resident),          # wq_t
                pl.BlockSpec((E, E), resident),          # wk_t
                pl.BlockSpec((E, E), resident),          # wv_t
                pl.BlockSpec((E, E), resident),          # wo_t
                pl.BlockSpec((1, E), resident),          # bq
                pl.BlockSpec((1, E), resident),          # bk
                pl.BlockSpec((1, E), resident),          # bv
                pl.BlockSpec((1, E), resident),          # bo
                pl.BlockSpec((1, E), resident),          # ln1 gamma
                pl.BlockSpec((1, E), resident),          # ln1 beta
                pl.BlockSpec((1, E), resident),          # ln2 gamma
                pl.BlockSpec((1, E), resident),          # ln2 beta
            ],
            out_specs=pl.BlockSpec((None, L, E), per_batch),
        ),
        compiler_params=pltpu.CompilerParams(
            dimension_semantics=("parallel",),
            vmem_limit_bytes=_vmem_limit_bytes(L, E),
        ),
    )(x_nle,
      kparams["wq_t"], kparams["wk_t"], kparams["wv_t"], kparams["wo_t"],
      kparams["bq"], kparams["bk"], kparams["bv"], kparams["bo"],
      kparams["g1"], kparams["be1"], kparams["g2"], kparams["be2"])

    return jnp.transpose(out_nle, (1, 0, 2))    # back to (L, N, E)


def init_params(key, embed_dim):
    """Torch-layout parameters of SelfAttentionLayer."""
    k1, k2 = jax.random.split(key, 2)
    return {
        "in_proj_weight": 0.02 * jax.random.normal(
            k1, (3 * embed_dim, embed_dim), jnp.float32),
        "in_proj_bias": jnp.zeros((3 * embed_dim,), jnp.float32),
        "out_proj_weight": 0.02 * jax.random.normal(
            k2, (embed_dim, embed_dim), jnp.float32),
        "out_proj_bias": jnp.zeros((embed_dim,), jnp.float32),
        "ln1_weight": jnp.ones((embed_dim,), jnp.float32),
        "ln1_bias": jnp.zeros((embed_dim,), jnp.float32),
        "ln2_weight": jnp.ones((embed_dim,), jnp.float32),
        "ln2_bias": jnp.zeros((embed_dim,), jnp.float32),
    }


def prepare_params(params, *, num_heads):
    """One-time host-side prep: split / transpose / bf16-cast the projection
    weights and fold the 1/sqrt(hd) attention scale into Wq / bq."""
    E = params["out_proj_weight"].shape[0]
    hd = E // num_heads
    scale = 1.0 / math.sqrt(hd)
    w_in = params["in_proj_weight"]            # (3E, E), torch (out_features, in_features)
    b_in = params["in_proj_bias"]              # (3E,)
    return {
        "wq_t": (w_in[:E] * scale).T.astype(jnp.bfloat16),        # (E, E)
        "wk_t": w_in[E:2 * E].T.astype(jnp.bfloat16),             # (E, E)
        "wv_t": w_in[2 * E:].T.astype(jnp.bfloat16),              # (E, E)
        "wo_t": params["out_proj_weight"].T.astype(jnp.bfloat16), # (E, E)
        "bq": (b_in[:E] * scale).reshape(1, E).astype(jnp.float32),
        "bk": b_in[E:2 * E].reshape(1, E).astype(jnp.float32),
        "bv": b_in[2 * E:].reshape(1, E).astype(jnp.float32),
        "bo": params["out_proj_bias"].reshape(1, E).astype(jnp.float32),
        "g1": params["ln1_weight"].reshape(1, E).astype(jnp.float32),
        "be1": params["ln1_bias"].reshape(1, E).astype(jnp.float32),
        "g2": params["ln2_weight"].reshape(1, E).astype(jnp.float32),
        "be2": params["ln2_bias"].reshape(1, E).astype(jnp.float32),
    }


if __name__ == "__main__":
    L, N, E, H = 8, 2, 32, 4          # seq, batch, embed_dim, num_heads
    key = jax.random.PRNGKey(0)
    kx, kp = jax.random.split(key)
    x = jax.random.normal(kx, (L, N, E), jnp.float32)   # (seq, batch, embed)
    params = init_params(kp, E)
    kparams = prepare_params(params, num_heads=H)

    y = self_attention_layer(x, kparams, num_heads=H)
    jax.block_until_ready(y)
    assert y.shape == (L, N, E)
    assert bool(jnp.all(jnp.isfinite(y)))
    print("KERNEL_OK")
</pallas_src>

<mosaic_0001>
module attributes {stable_mosaic.version = 11 : i64} {
  func.func @_mha_ln_kernel(%arg0: i32, %arg1: memref<1x8x32xf32, #tpu.memory_space<vmem>>, %arg2: memref<32x32xbf16, #tpu.memory_space<vmem>>, %arg3: memref<32x32xbf16, #tpu.memory_space<vmem>>, %arg4: memref<32x32xbf16, #tpu.memory_space<vmem>>, %arg5: memref<32x32xbf16, #tpu.memory_space<vmem>>, %arg6: memref<1x32xf32, #tpu.memory_space<vmem>>, %arg7: memref<1x32xf32, #tpu.memory_space<vmem>>, %arg8: memref<1x32xf32, #tpu.memory_space<vmem>>, %arg9: memref<1x32xf32, #tpu.memory_space<vmem>>, %arg10: memref<1x32xf32, #tpu.memory_space<vmem>>, %arg11: memref<1x32xf32, #tpu.memory_space<vmem>>, %arg12: memref<1x32xf32, #tpu.memory_space<vmem>>, %arg13: memref<1x32xf32, #tpu.memory_space<vmem>>, %arg14: memref<1x8x32xf32, #tpu.memory_space<vmem>>) attributes {dimension_semantics = [#tpu.dimension_semantics<parallel>], iteration_bounds = array<i64: 2>, scalar_prefetch = 0 : i64, scratch_operands = 0 : i64, tpu.core_type = #tpu.core_type<tc>, window_params = [{transform_indices = @transform_0, window_bounds = array<i64: 1, 8, 32>}, {pipeline_mode = #tpu.pipeline_mode<synchronous>, transform_indices = @transform_1, window_bounds = array<i64: 32, 32>}, {pipeline_mode = #tpu.pipeline_mode<synchronous>, transform_indices = @transform_2, window_bounds = array<i64: 32, 32>}, {pipeline_mode = #tpu.pipeline_mode<synchronous>, transform_indices = @transform_3, window_bounds = array<i64: 32, 32>}, {pipeline_mode = #tpu.pipeline_mode<synchronous>, transform_indices = @transform_4, window_bounds = array<i64: 32, 32>}, {pipeline_mode = #tpu.pipeline_mode<synchronous>, transform_indices = @transform_5, window_bounds = array<i64: 1, 32>}, {pipeline_mode = #tpu.pipeline_mode<synchronous>, transform_indices = @transform_6, window_bounds = array<i64: 1, 32>}, {pipeline_mode = #tpu.pipeline_mode<synchronous>, transform_indices = @transform_7, window_bounds = array<i64: 1, 32>}, {pipeline_mode = #tpu.pipeline_mode<synchronous>, transform_indices = @transform_8, window_bounds = array<i64: 1, 32>}, {pipeline_mode = #tpu.pipeline_mode<synchronous>, transform_indices = @transform_9, window_bounds = array<i64: 1, 32>}, {pipeline_mode = #tpu.pipeline_mode<synchronous>, transform_indices = @transform_10, window_bounds = array<i64: 1, 32>}, {pipeline_mode = #tpu.pipeline_mode<synchronous>, transform_indices = @transform_11, window_bounds = array<i64: 1, 32>}, {pipeline_mode = #tpu.pipeline_mode<synchronous>, transform_indices = @transform_12, window_bounds = array<i64: 1, 32>}, {transform_indices = @transform_13, window_bounds = array<i64: 1, 8, 32>}]} {
    %c0 = arith.constant 0 : index
    %c0_0 = arith.constant 0 : index
    %c0_1 = arith.constant 0 : index
    %0 = vector.load %arg1[%c0, %c0_0, %c0_1] : memref<1x8x32xf32, #tpu.memory_space<vmem>>, vector<1x8x32xf32>
    %1 = vector.shape_cast %0 : vector<1x8x32xf32> to vector<8x32xf32>
    %2 = arith.truncf %1 : vector<8x32xf32> to vector<8x32xbf16>
    %c0_2 = arith.constant 0 : index
    %c0_3 = arith.constant 0 : index
    %3 = vector.load %arg2[%c0_2, %c0_3] : memref<32x32xbf16, #tpu.memory_space<vmem>>, vector<32x32xbf16>
    %cst = arith.constant dense<0.000000e+00> : vector<8x32xf32>
    %4 = tpu.matmul %2, %3, %cst {dimension_numbers = #tpu.dot_dimension_numbers<[1], [0], [0], [1], [0, 0, 1, 1], [], []>} : vector<8x32xbf16>, vector<32x32xbf16>, vector<8x32xf32> -> vector<8x32xf32>
    %c0_4 = arith.constant 0 : index
    %c0_5 = arith.constant 0 : index
    %5 = vector.load %arg6[%c0_4, %c0_5] : memref<1x32xf32, #tpu.memory_space<vmem>>, vector<1x32xf32>
    %6 = vector.broadcast %5 : vector<1x32xf32> to vector<8x32xf32>
    %7 = arith.addf %4, %6 : vector<8x32xf32>
    %c0_6 = arith.constant 0 : index
    %c0_7 = arith.constant 0 : index
    %8 = vector.load %arg3[%c0_6, %c0_7] : memref<32x32xbf16, #tpu.memory_space<vmem>>, vector<32x32xbf16>
    %cst_8 = arith.constant dense<0.000000e+00> : vector<8x32xf32>
    %9 = tpu.matmul %2, %8, %cst_8 {dimension_numbers = #tpu.dot_dimension_numbers<[1], [0], [0], [1], [0, 0, 1, 1], [], []>} : vector<8x32xbf16>, vector<32x32xbf16>, vector<8x32xf32> -> vector<8x32xf32>
    %c0_9 = arith.constant 0 : index
    %c0_10 = arith.constant 0 : index
    %10 = vector.load %arg7[%c0_9, %c0_10] : memref<1x32xf32, #tpu.memory_space<vmem>>, vector<1x32xf32>
    %11 = vector.broadcast %10 : vector<1x32xf32> to vector<8x32xf32>
    %12 = arith.addf %9, %11 : vector<8x32xf32>
    %c0_11 = arith.constant 0 : index
    %c0_12 = arith.constant 0 : index
    %13 = vector.load %arg4[%c0_11, %c0_12] : memref<32x32xbf16, #tpu.memory_space<vmem>>, vector<32x32xbf16>
    %cst_13 = arith.constant dense<0.000000e+00> : vector<8x32xf32>
    %14 = tpu.matmul %2, %13, %cst_13 {dimension_numbers = #tpu.dot_dimension_numbers<[1], [0], [0], [1], [0, 0, 1, 1], [], []>} : vector<8x32xbf16>, vector<32x32xbf16>, vector<8x32xf32> -> vector<8x32xf32>
    %c0_14 = arith.constant 0 : index
    %c0_15 = arith.constant 0 : index
    %15 = vector.load %arg8[%c0_14, %c0_15] : memref<1x32xf32, #tpu.memory_space<vmem>>, vector<1x32xf32>
    %16 = vector.broadcast %15 : vector<1x32xf32> to vector<8x32xf32>
    %17 = arith.addf %14, %16 : vector<8x32xf32>
    %18 = arith.truncf %7 : vector<8x32xf32> to vector<8x32xbf16>
    %19 = arith.truncf %12 : vector<8x32xf32> to vector<8x32xbf16>
    %20 = arith.truncf %17 : vector<8x32xf32> to vector<8x32xbf16>
    %21 = vector.extract_strided_slice %18 {offsets = [0, 0], sizes = [8, 8], strides = [1, 1]} : vector<8x32xbf16> to vector<8x8xbf16>
    %22 = vector.extract_strided_slice %19 {offsets = [0, 0], sizes = [8, 8], strides = [1, 1]} : vector<8x32xbf16> to vector<8x8xbf16>
    %23 = vector.extract_strided_slice %20 {offsets = [0, 0], sizes = [8, 8], strides = [1, 1]} : vector<8x32xbf16> to vector<8x8xbf16>
    "tpu.trace_start"() <{level = 10 : i32, message = "qd,kd->qk"}> : () -> ()
    %cst_16 = arith.constant dense<0.000000e+00> : vector<8x8xf32>
    %24 = tpu.matmul %21, %22, %cst_16 {dimension_numbers = #tpu.dot_dimension_numbers<[1], [1], [0], [0], [0, 0, 1, 0], [], []>} : vector<8x8xbf16>, vector<8x8xbf16>, vector<8x8xf32> -> vector<8x8xf32>
    "tpu.trace_stop"() : () -> ()
    %cst_17 = arith.constant dense<0xFF800000> : vector<8xf32>
    %25 = vector.multi_reduction <maximumf>, %24, %cst_17 [1] : vector<8x8xf32> to vector<8xf32>
    %26 = vector.shape_cast %25 : vector<8xf32> to vector<8x1xf32>
    %27 = vector.broadcast %26 : vector<8x1xf32> to vector<8x8xf32>
    %28 = arith.subf %24, %27 : vector<8x8xf32>
    %29 = math.exp %28 : vector<8x8xf32>
    %cst_18 = arith.constant dense<0.000000e+00> : vector<8xf32>
    %30 = vector.multi_reduction <add>, %29, %cst_18 [1] : vector<8x8xf32> to vector<8xf32>
    %31 = vector.shape_cast %30 : vector<8xf32> to vector<8x1xf32>
    %32 = arith.truncf %29 : vector<8x8xf32> to vector<8x8xbf16>
    %cst_19 = arith.constant dense<0.000000e+00> : vector<8x8xf32>
    %33 = tpu.matmul %32, %23, %cst_19 {dimension_numbers = #tpu.dot_dimension_numbers<[1], [0], [0], [1], [0, 0, 1, 1], [], []>} : vector<8x8xbf16>, vector<8x8xbf16>, vector<8x8xf32> -> vector<8x8xf32>
    %34 = tpu.reciprocal %31 {approx = true} : vector<8x1xf32> -> vector<8x1xf32>
    %35 = vector.broadcast %34 : vector<8x1xf32> to vector<8x8xf32>
    %36 = arith.mulf %33, %35 : vector<8x8xf32>
    %37 = vector.extract_strided_slice %18 {offsets = [0, 8], sizes = [8, 8], strides = [1, 1]} : vector<8x32xbf16> to vector<8x8xbf16>
    %38 = vector.extract_strided_slice %19 {offsets = [0, 8], sizes = [8, 8], strides = [1, 1]} : vector<8x32xbf16> to vector<8x8xbf16>
    %39 = vector.extract_strided_slice %20 {offsets = [0, 8], sizes = [8, 8], strides = [1, 1]} : vector<8x32xbf16> to vector<8x8xbf16>
    "tpu.trace_start"() <{level = 10 : i32, message = "qd,kd->qk"}> : () -> ()
    %cst_20 = arith.constant dense<0.000000e+00> : vector<8x8xf32>
    %40 = tpu.matmul %37, %38, %cst_20 {dimension_numbers = #tpu.dot_dimension_numbers<[1], [1], [0], [0], [0, 0, 1, 0], [], []>} : vector<8x8xbf16>, vector<8x8xbf16>, vector<8x8xf32> -> vector<8x8xf32>
    "tpu.trace_stop"() : () -> ()
    %cst_21 = arith.constant dense<0xFF800000> : vector<8xf32>
    %41 = vector.multi_reduction <maximumf>, %40, %cst_21 [1] : vector<8x8xf32> to vector<8xf32>
    %42 = vector.shape_cast %41 : vector<8xf32> to vector<8x1xf32>
    %43 = vector.broadcast %42 : vector<8x1xf32> to vector<8x8xf32>
    %44 = arith.subf %40, %43 : vector<8x8xf32>
    %45 = math.exp %44 : vector<8x8xf32>
    %cst_22 = arith.constant dense<0.000000e+00> : vector<8xf32>
    %46 = vector.multi_reduction <add>, %45, %cst_22 [1] : vector<8x8xf32> to vector<8xf32>
    %47 = vector.shape_cast %46 : vector<8xf32> to vector<8x1xf32>
    %48 = arith.truncf %45 : vector<8x8xf32> to vector<8x8xbf16>
    %cst_23 = arith.constant dense<0.000000e+00> : vector<8x8xf32>
    %49 = tpu.matmul %48, %39, %cst_23 {dimension_numbers = #tpu.dot_dimension_numbers<[1], [0], [0], [1], [0, 0, 1, 1], [], []>} : vector<8x8xbf16>, vector<8x8xbf16>, vector<8x8xf32> -> vector<8x8xf32>
    %50 = tpu.reciprocal %47 {approx = true} : vector<8x1xf32> -> vector<8x1xf32>
    %51 = vector.broadcast %50 : vector<8x1xf32> to vector<8x8xf32>
    %52 = arith.mulf %49, %51 : vector<8x8xf32>
    %53 = vector.extract_strided_slice %18 {offsets = [0, 16], sizes = [8, 8], strides = [1, 1]} : vector<8x32xbf16> to vector<8x8xbf16>
    %54 = vector.extract_strided_slice %19 {offsets = [0, 16], sizes = [8, 8], strides = [1, 1]} : vector<8x32xbf16> to vector<8x8xbf16>
    %55 = vector.extract_strided_slice %20 {offsets = [0, 16], sizes = [8, 8], strides = [1, 1]} : vector<8x32xbf16> to vector<8x8xbf16>
    "tpu.trace_start"() <{level = 10 : i32, message = "qd,kd->qk"}> : () -> ()
    %cst_24 = arith.constant dense<0.000000e+00> : vector<8x8xf32>
    %56 = tpu.matmul %53, %54, %cst_24 {dimension_numbers = #tpu.dot_dimension_numbers<[1], [1], [0], [0], [0, 0, 1, 0], [], []>} : vector<8x8xbf16>, vector<8x8xbf16>, vector<8x8xf32> -> vector<8x8xf32>
    "tpu.trace_stop"() : () -> ()
    %cst_25 = arith.constant dense<0xFF800000> : vector<8xf32>
    %57 = vector.multi_reduction <maximumf>, %56, %cst_25 [1] : vector<8x8xf32> to vector<8xf32>
    %58 = vector.shape_cast %57 : vector<8xf32> to vector<8x1xf32>
    %59 = vector.broadcast %58 : vector<8x1xf32> to vector<8x8xf32>
    %60 = arith.subf %56, %59 : vector<8x8xf32>
    %61 = math.exp %60 : vector<8x8xf32>
    %cst_26 = arith.constant dense<0.000000e+00> : vector<8xf32>
    %62 = vector.multi_reduction <add>, %61, %cst_26 [1] : vector<8x8xf32> to vector<8xf32>
    %63 = vector.shape_cast %62 : vector<8xf32> to vector<8x1xf32>
    %64 = arith.truncf %61 : vector<8x8xf32> to vector<8x8xbf16>
    %cst_27 = arith.constant dense<0.000000e+00> : vector<8x8xf32>
    %65 = tpu.matmul %64, %55, %cst_27 {dimension_numbers = #tpu.dot_dimension_numbers<[1], [0], [0], [1], [0, 0, 1, 1], [], []>} : vector<8x8xbf16>, vector<8x8xbf16>, vector<8x8xf32> -> vector<8x8xf32>
    %66 = tpu.reciprocal %63 {approx = true} : vector<8x1xf32> -> vector<8x1xf32>
    %67 = vector.broadcast %66 : vector<8x1xf32> to vector<8x8xf32>
    %68 = arith.mulf %65, %67 : vector<8x8xf32>
    %69 = vector.extract_strided_slice %18 {offsets = [0, 24], sizes = [8, 8], strides = [1, 1]} : vector<8x32xbf16> to vector<8x8xbf16>
    %70 = vector.extract_strided_slice %19 {offsets = [0, 24], sizes = [8, 8], strides = [1, 1]} : vector<8x32xbf16> to vector<8x8xbf16>
    %71 = vector.extract_strided_slice %20 {offsets = [0, 24], sizes = [8, 8], strides = [1, 1]} : vector<8x32xbf16> to vector<8x8xbf16>
    "tpu.trace_start"() <{level = 10 : i32, message = "qd,kd->qk"}> : () -> ()
    %cst_28 = arith.constant dense<0.000000e+00> : vector<8x8xf32>
    %72 = tpu.matmul %69, %70, %cst_28 {dimension_numbers = #tpu.dot_dimension_numbers<[1], [1], [0], [0], [0, 0, 1, 0], [], []>} : vector<8x8xbf16>, vector<8x8xbf16>, vector<8x8xf32> -> vector<8x8xf32>
    "tpu.trace_stop"() : () -> ()
    %cst_29 = arith.constant dense<0xFF800000> : vector<8xf32>
    %73 = vector.multi_reduction <maximumf>, %72, %cst_29 [1] : vector<8x8xf32> to vector<8xf32>
    %74 = vector.shape_cast %73 : vector<8xf32> to vector<8x1xf32>
    %75 = vector.broadcast %74 : vector<8x1xf32> to vector<8x8xf32>
    %76 = arith.subf %72, %75 : vector<8x8xf32>
    %77 = math.exp %76 : vector<8x8xf32>
    %cst_30 = arith.constant dense<0.000000e+00> : vector<8xf32>
    %78 = vector.multi_reduction <add>, %77, %cst_30 [1] : vector<8x8xf32> to vector<8xf32>
    %79 = vector.shape_cast %78 : vector<8xf32> to vector<8x1xf32>
    %80 = arith.truncf %77 : vector<8x8xf32> to vector<8x8xbf16>
    %cst_31 = arith.constant dense<0.000000e+00> : vector<8x8xf32>
    %81 = tpu.matmul %80, %71, %cst_31 {dimension_numbers = #tpu.dot_dimension_numbers<[1], [0], [0], [1], [0, 0, 1, 1], [], []>} : vector<8x8xbf16>, vector<8x8xbf16>, vector<8x8xf32> -> vector<8x8xf32>
    %82 = tpu.reciprocal %79 {approx = true} : vector<8x1xf32> -> vector<8x1xf32>
    %83 = vector.broadcast %82 : vector<8x1xf32> to vector<8x8xf32>
    %84 = arith.mulf %81, %83 : vector<8x8xf32>
    %85 = tpu.concatenate %36, %52, %68, %84 in 1 : vector<8x8xf32>, vector<8x8xf32>, vector<8x8xf32>, vector<8x8xf32> -> vector<8x32xf32>
    %86 = arith.truncf %85 : vector<8x32xf32> to vector<8x32xbf16>
    %c0_32 = arith.constant 0 : index
    %c0_33 = arith.constant 0 : index
    %87 = vector.load %arg5[%c0_32, %c0_33] : memref<32x32xbf16, #tpu.memory_space<vmem>>, vector<32x32xbf16>
    %cst_34 = arith.constant dense<0.000000e+00> : vector<8x32xf32>
    %88 = tpu.matmul %86, %87, %cst_34 {dimension_numbers = #tpu.dot_dimension_numbers<[1], [0], [0], [1], [0, 0, 1, 1], [], []>} : vector<8x32xbf16>, vector<32x32xbf16>, vector<8x32xf32> -> vector<8x32xf32>
    %c0_35 = arith.constant 0 : index
    %c0_36 = arith.constant 0 : index
    %89 = vector.load %arg9[%c0_35, %c0_36] : memref<1x32xf32, #tpu.memory_space<vmem>>, vector<1x32xf32>
    %90 = vector.broadcast %89 : vector<1x32xf32> to vector<8x32xf32>
    %91 = arith.addf %88, %90 : vector<8x32xf32>
    %92 = arith.addf %1, %91 : vector<8x32xf32>
    %cst_37 = arith.constant dense<0.000000e+00> : vector<8xf32>
    %93 = vector.multi_reduction <add>, %92, %cst_37 [1] : vector<8x32xf32> to vector<8xf32>
    %94 = vector.shape_cast %93 : vector<8xf32> to vector<8x1xf32>
    %cst_38 = arith.constant 3.200000e+01 : f32
    %95 = vector.broadcast %cst_38 : f32 to vector<8x1xf32>
    %96 = arith.divf %94, %95 : vector<8x1xf32>
    %97 = vector.broadcast %96 : vector<8x1xf32> to vector<8x32xf32>
    %98 = arith.subf %92, %97 : vector<8x32xf32>
    %99 = arith.mulf %98, %98 : vector<8x32xf32>
    %cst_39 = arith.constant dense<0.000000e+00> : vector<8xf32>
    %100 = vector.multi_reduction <add>, %99, %cst_39 [1] : vector<8x32xf32> to vector<8xf32>
    %101 = vector.shape_cast %100 : vector<8xf32> to vector<8x1xf32>
    %cst_40 = arith.constant 3.200000e+01 : f32
    %102 = vector.broadcast %cst_40 : f32 to vector<8x1xf32>
    %103 = arith.divf %101, %102 : vector<8x1xf32>
    %104 = vector.broadcast %96 : vector<8x1xf32> to vector<8x32xf32>
    %105 = arith.subf %92, %104 : vector<8x32xf32>
    %cst_41 = arith.constant 9.99999974E-6 : f32
    %106 = vector.broadcast %cst_41 : f32 to vector<8x1xf32>
    %107 = arith.addf %103, %106 : vector<8x1xf32>
    %108 = math.rsqrt %107 : vector<8x1xf32>
    %109 = vector.broadcast %108 : vector<8x1xf32> to vector<8x32xf32>
    %110 = arith.mulf %105, %109 : vector<8x32xf32>
    %c0_42 = arith.constant 0 : index
    %c0_43 = arith.constant 0 : index
    %111 = vector.load %arg10[%c0_42, %c0_43] : memref<1x32xf32, #tpu.memory_space<vmem>>, vector<1x32xf32>
    %112 = vector.broadcast %111 : vector<1x32xf32> to vector<8x32xf32>
    %113 = arith.mulf %110, %112 : vector<8x32xf32>
    %c0_44 = arith.constant 0 : index
    %c0_45 = arith.constant 0 : index
    %114 = vector.load %arg11[%c0_44, %c0_45] : memref<1x32xf32, #tpu.memory_space<vmem>>, vector<1x32xf32>
    %115 = vector.broadcast %114 : vector<1x32xf32> to vector<8x32xf32>
    %116 = arith.addf %113, %115 : vector<8x32xf32>
    %cst_46 = arith.constant dense<0.000000e+00> : vector<8xf32>
    %117 = vector.multi_reduction <add>, %116, %cst_46 [1] : vector<8x32xf32> to vector<8xf32>
    %118 = vector.shape_cast %117 : vector<8xf32> to vector<8x1xf32>
    %cst_47 = arith.constant 3.200000e+01 : f32
    %119 = vector.broadcast %cst_47 : f32 to vector<8x1xf32>
    %120 = arith.divf %118, %119 : vector<8x1xf32>
    %121 = vector.broadcast %120 : vector<8x1xf32> to vector<8x32xf32>
    %122 = arith.subf %116, %121 : vector<8x32xf32>
    %123 = arith.mulf %122, %122 : vector<8x32xf32>
    %cst_48 = arith.constant dense<0.000000e+00> : vector<8xf32>
    %124 = vector.multi_reduction <add>, %123, %cst_48 [1] : vector<8x32xf32> to vector<8xf32>
    %125 = vector.shape_cast %124 : vector<8xf32> to vector<8x1xf32>
    %cst_49 = arith.constant 3.200000e+01 : f32
    %126 = vector.broadcast %cst_49 : f32 to vector<8x1xf32>
    %127 = arith.divf %125, %126 : vector<8x1xf32>
    %128 = vector.broadcast %120 : vector<8x1xf32> to vector<8x32xf32>
    %129 = arith.subf %116, %128 : vector<8x32xf32>
    %cst_50 = arith.constant 9.99999974E-6 : f32
    %130 = vector.broadcast %cst_50 : f32 to vector<8x1xf32>
    %131 = arith.addf %127, %130 : vector<8x1xf32>
    %132 = math.rsqrt %131 : vector<8x1xf32>
    %133 = vector.broadcast %132 : vector<8x1xf32> to vector<8x32xf32>
    %134 = arith.mulf %129, %133 : vector<8x32xf32>
    %c0_51 = arith.constant 0 : index
    %c0_52 = arith.constant 0 : index
    %135 = vector.load %arg12[%c0_51, %c0_52] : memref<1x32xf32, #tpu.memory_space<vmem>>, vector<1x32xf32>
    %136 = vector.broadcast %135 : vector<1x32xf32> to vector<8x32xf32>
    %137 = arith.mulf %134, %136 : vector<8x32xf32>
    %c0_53 = arith.constant 0 : index
    %c0_54 = arith.constant 0 : index
    %138 = vector.load %arg13[%c0_53, %c0_54] : memref<1x32xf32, #tpu.memory_space<vmem>>, vector<1x32xf32>
    %139 = vector.broadcast %138 : vector<1x32xf32> to vector<8x32xf32>
    %140 = arith.addf %137, %139 : vector<8x32xf32>
    %c0_55 = arith.constant 0 : index
    %c0_56 = arith.constant 0 : index
    %c0_57 = arith.constant 0 : index
    %141 = vector.load %arg14[%c0_55, %c0_56, %c0_57] : memref<1x8x32xf32, #tpu.memory_space<vmem>>, vector<1x8x32xf32>
    %142 = vector.shape_cast %141 : vector<1x8x32xf32> to vector<8x32xf32>
    %143 = vector.shape_cast %140 : vector<8x32xf32> to vector<1x8x32xf32>
    tpu.vector_store %arg14[%c0_55, %c0_56, %c0_57], %143 {strides = array<i32>} : memref<1x8x32xf32, #tpu.memory_space<vmem>>, vector<1x8x32xf32>,
    return
  }
  func.func @transform_0(%arg0: i32) -> (i32, i32, i32) {
    %c0_i32 = arith.constant 0 : i32
    %c0_i32_0 = arith.constant 0 : i32
    %c0_i32_1 = arith.constant 0 : i32
    return %arg0, %c0_i32, %c0_i32_0 : i32, i32, i32
  }
  func.func @transform_1(%arg0: i32) -> (i32, i32) {
    %c0_i32 = arith.constant 0 : i32
    %c0_i32_0 = arith.constant 0 : i32
    %c0_i32_1 = arith.constant 0 : i32
    return %c0_i32, %c0_i32_0 : i32, i32
  }
  func.func @transform_2(%arg0: i32) -> (i32, i32) {
    %c0_i32 = arith.constant 0 : i32
    %c0_i32_0 = arith.constant 0 : i32
    %c0_i32_1 = arith.constant 0 : i32
    return %c0_i32, %c0_i32_0 : i32, i32
  }
  func.func @transform_3(%arg0: i32) -> (i32, i32) {
    %c0_i32 = arith.constant 0 : i32
    %c0_i32_0 = arith.constant 0 : i32
    %c0_i32_1 = arith.constant 0 : i32
    return %c0_i32, %c0_i32_0 : i32, i32
  }
  func.func @transform_4(%arg0: i32) -> (i32, i32) {
    %c0_i32 = arith.constant 0 : i32
    %c0_i32_0 = arith.constant 0 : i32
    %c0_i32_1 = arith.constant 0 : i32
    return %c0_i32, %c0_i32_0 : i32, i32
  }
  func.func @transform_5(%arg0: i32) -> (i32, i32) {
    %c0_i32 = arith.constant 0 : i32
    %c0_i32_0 = arith.constant 0 : i32
    %c0_i32_1 = arith.constant 0 : i32
    return %c0_i32, %c0_i32_0 : i32, i32
  }
  func.func @transform_6(%arg0: i32) -> (i32, i32) {
    %c0_i32 = arith.constant 0 : i32
    %c0_i32_0 = arith.constant 0 : i32
    %c0_i32_1 = arith.constant 0 : i32
    return %c0_i32, %c0_i32_0 : i32, i32
  }
  func.func @transform_7(%arg0: i32) -> (i32, i32) {
    %c0_i32 = arith.constant 0 : i32
    %c0_i32_0 = arith.constant 0 : i32
    %c0_i32_1 = arith.constant 0 : i32
    return %c0_i32, %c0_i32_0 : i32, i32
  }
  func.func @transform_8(%arg0: i32) -> (i32, i32) {
    %c0_i32 = arith.constant 0 : i32
    %c0_i32_0 = arith.constant 0 : i32
    %c0_i32_1 = arith.constant 0 : i32
    return %c0_i32, %c0_i32_0 : i32, i32
  }
  func.func @transform_9(%arg0: i32) -> (i32, i32) {
    %c0_i32 = arith.constant 0 : i32
    %c0_i32_0 = arith.constant 0 : i32
    %c0_i32_1 = arith.constant 0 : i32
    return %c0_i32, %c0_i32_0 : i32, i32
  }
  func.func @transform_10(%arg0: i32) -> (i32, i32) {
    %c0_i32 = arith.constant 0 : i32
    %c0_i32_0 = arith.constant 0 : i32
    %c0_i32_1 = arith.constant 0 : i32
    return %c0_i32, %c0_i32_0 : i32, i32
  }
  func.func @transform_11(%arg0: i32) -> (i32, i32) {
    %c0_i32 = arith.constant 0 : i32
    %c0_i32_0 = arith.constant 0 : i32
    %c0_i32_1 = arith.constant 0 : i32
    return %c0_i32, %c0_i32_0 : i32, i32
  }
  func.func @transform_12(%arg0: i32) -> (i32, i32) {
    %c0_i32 = arith.constant 0 : i32
    %c0_i32_0 = arith.constant 0 : i32
    %c0_i32_1 = arith.constant 0 : i32
    return %c0_i32, %c0_i32_0 : i32, i32
  }
  func.func @transform_13(%arg0: i32) -> (i32, i32, i32) {
    %c0_i32 = arith.constant 0 : i32
    %c0_i32_0 = arith.constant 0 : i32
    %c0_i32_1 = arith.constant 0 : i32
    return %arg0, %c0_i32, %c0_i32_0 : i32, i32, i32
  }
}

</mosaic_0001>

<llo_original>
// kernel: tpu_custom_call.1
$region0: #{tpu_custom_call.1}
  #allocation0 [shape = 'u32[]', space=smem, size = 0x4, offset = 0x4, fixed_abs, tag = 'smem constant byte address 0x4 - core index']
  #allocation1 [shape = 'u32[144,128]{1,0:T(1,128)}', space=vmem, size = 0x12000, scoped, tag = 'internal scratch']
  %s0 = inlined_call_operand.hbm [shape: f32[2,8,32], index: 0, kind: input, shape index: {}]
  %s1 = inlined_call_operand.hbm [shape: bf16[32,32], index: 1, kind: input, shape index: {}]
  %s2 = inlined_call_operand.hbm [shape: bf16[32,32], index: 2, kind: input, shape index: {}]
  %s3 = inlined_call_operand.hbm [shape: bf16[32,32], index: 3, kind: input, shape index: {}]
  %s4 = inlined_call_operand.hbm [shape: bf16[32,32], index: 4, kind: input, shape index: {}]
  %s5 = inlined_call_operand.vmem [shape: f32[1,32], index: 5, kind: input, shape index: {}]
  %s6 = inlined_call_operand.vmem [shape: f32[1,32], index: 6, kind: input, shape index: {}]
  %s7 = inlined_call_operand.vmem [shape: f32[1,32], index: 7, kind: input, shape index: {}]
  %s8 = inlined_call_operand.vmem [shape: f32[1,32], index: 8, kind: input, shape index: {}]
  %s9 = inlined_call_operand.vmem [shape: f32[1,32], index: 9, kind: input, shape index: {}]
  %s10 = inlined_call_operand.vmem [shape: f32[1,32], index: 10, kind: input, shape index: {}]
  %s11 = inlined_call_operand.vmem [shape: f32[1,32], index: 11, kind: input, shape index: {}]
  %s12 = inlined_call_operand.vmem [shape: f32[1,32], index: 12, kind: input, shape index: {}]
  %s13 = inlined_call_operand.hbm [shape: f32[2,8,32], index: 13, kind: output, shape index: {}]
  %s14 = sld [smem:[#allocation0]]
  $region105: #{tpu_custom_call.1} parent=0
    _
  %s16 = ssub.s32 1, %s14
  %s17 = scalar_select 0, %s16, %s14
  $region1: #{tpu_custom_call.1} parent=0
    #allocation2 [shape = 'u8[8192]{0}', space=vmem, size = 0x2000, scoped, tag = 'input window, operand 0']
    #allocation3 [shape = 's32[2]{0}', space=sflag, size = 0x8, scoped, tag = 'scoped memory for tpu_custom_call.1']
    #allocation4 [shape = 's32[2]{0}', space=sflag, size = 0x8, scoped, tag = 'scoped memory for tpu_custom_call.1']
    #allocation5 [shape = 'u8[8192]{0}', space=vmem, size = 0x2000, scoped, tag = 'input window, operand 1, single buffered']
    #allocation6 [shape = 's32[1]{0}', space=sflag, size = 0x4, scoped, tag = 'scoped memory for tpu_custom_call.1']
    #allocation7 [shape = 'u8[8192]{0}', space=vmem, size = 0x2000, scoped, tag = 'input window, operand 2, single buffered']
    #allocation8 [shape = 'u8[8192]{0}', space=vmem, size = 0x2000, scoped, tag = 'input window, operand 3, single buffered']
    #allocation9 [shape = 's32[1]{0}', space=sflag, size = 0x4, scoped, tag = 'scoped memory for tpu_custom_call.1']
    #allocation10 [shape = 'u8[8192]{0}', space=vmem, size = 0x2000, scoped, tag = 'input window, operand 4, single buffered']
    #allocation11 [shape = 'u8[8192]{0}', space=vmem, size = 0x2000, scoped, tag = 'output window, operand 0']
    %18 = vsyncpa [#allocation3], 0
    %s19 = scalar_lea.sflag [#allocation3], 1
    %20 = vsyncpa %s19, 0
    %21 = vsyncpa [#allocation6], 0
    %22 = vsyncpa [#allocation9], 0
    %23 = vsyncpa [#allocation4], 0
    %s24 = scalar_lea.sflag [#allocation4], 1
    %25 = vsyncpa %s24, 0
    loop: start=0, step=1, limit=4
    $region2: #{tpu_custom_call.1} parent=1 // loop_pre_header
      _
    $region3: #{tpu_custom_call.1} parent=1 // loop_header
      %s27 = sphi 0, %s31
      %p28 = scmp.ge.s32.totalorder %s27, 4
      %s37 = sphi 0, %s39
      %s40 = sphi 0, %s37
      %s41 = sphi 0, %s40
      %s57 = sphi 0, %s41
      %s61 = sphi 0, %s61
      %s63 = sphi 0, %s61
      %s64 = sphi 0, %s63
      %s78 = sphi 0, %s64
      %s82 = sphi 0, %s82
      %s84 = sphi 0, %s82
      %s85 = sphi 0, %s84
      %s99 = sphi 0, %s85
      %s103 = sphi 0, %s103
      %s105 = sphi 0, %s103
      %s106 = sphi 0, %s105
      %s120 = sphi 0, %s106
      %s124 = sphi 0, %s124
      %s126 = sphi 0, %s124
      %s127 = sphi 0, %s126
      %s141 = sphi 0, %s127
      %s145 = sphi 0, %s145
      %s147 = sphi 0, %s145
      %s148 = sphi 0, %s147
      %s162 = sphi 0, %s148
      %s166 = sphi 0, %s166
      %s168 = sphi 0, %s166
      %s169 = sphi 0, %s168
      %s183 = sphi 0, %s169
      %s187 = sphi 0, %s187
      %s189 = sphi 0, %s187
      %s190 = sphi 0, %s189
      %s204 = sphi 0, %s190
      %s208 = sphi 0, %s208
      %s210 = sphi 0, %s208
      %s211 = sphi 0, %s210
      %s225 = sphi 0, %s211
      %s229 = sphi 0, %s229
      %s231 = sphi 0, %s229
      %s232 = sphi 0, %s231
      %s246 = sphi 0, %s232
      %s250 = sphi 0, %s250
      %s252 = sphi 0, %s250
      %s253 = sphi 0, %s252
      %s267 = sphi 0, %s253
      %s271 = sphi 0, %s271
      %s273 = sphi 0, %s271
      %s274 = sphi 0, %s273
      %s288 = sphi 0, %s274
      %s292 = sphi 0, %s292
      %s294 = sphi 0, %s292
      %s295 = sphi 0, %s294
      %s309 = sphi 0, %s295
      %s315 = sphi 0, %s317
      %s318 = sphi 0, %s315
      %s319 = sphi 0, %s318
      %s335 = sphi 0, %s319
    $region4: #{tpu_custom_call.1} parent=1 // loop_header_branch
      %30 = sbr.rel (%p28) target = $region8
    $region5: #{tpu_custom_call.1} parent=1 // loop_body
      %s32 = ssub.s32 %s27, 1
      %s33 = ssub.s32 %s27, 2
      %s34 = sadd.s32 %s27, 1
      %s35 = ssub.s32 %s27, %s34
      %p36 = scmp.eq.s32.totalorder %s35, 0
      %s38 = sadd.s32 %s37, 1
      %s39 = scalar_select %p36, %s37, %s38
      %p42 = pneg %p36
      %p43 = scmp.eq.s32.totalorder %s27, 1
      %p44 = por %p42, %p43
      %p45 = scmp.ne.s32.totalorder %s37, %s40
      %p46 = scmp.eq.s32.totalorder %s27, 0
      %p47 = por %p45, %p46
      %p48 = scmp.ne.s32.totalorder %s37, %s40
      %p49 = scmp.eq.s32.totalorder %s32, 1
      %p50 = por %p48, %p49
      %p51 = scmp.ne.s32.totalorder %s40, %s41
      %p52 = scmp.eq.s32.totalorder %s32, 0
      %p53 = por %p51, %p52
      %p54 = scmp.ne.s32.totalorder %s40, %s41
      %p55 = scmp.eq.s32.totalorder %s33, 1
      %p56 = por %p54, %p55
      %p58 = scmp.ne.s32.totalorder %s41, %s57
      %p59 = scmp.eq.s32.totalorder %s33, 0
      %p60 = por %p58, %p59
      %s62 = sadd.s32 %s61, 1
      %p65 = scmp.eq.s32.totalorder %s27, 1
      %p66 = scmp.ne.s32.totalorder %s61, %s63
      %p67 = scmp.eq.s32.totalorder %s27, 0
      %p68 = por %p66, %p67
      %p69 = scmp.ne.s32.totalorder %s61, %s63
      %p70 = scmp.eq.s32.totalorder %s32, 1
      %p71 = por %p69, %p70
      %p72 = scmp.ne.s32.totalorder %s63, %s64
      %p73 = scmp.eq.s32.totalorder %s32, 0
      %p74 = por %p72, %p73
      %p75 = scmp.ne.s32.totalorder %s63, %s64
      %p76 = scmp.eq.s32.totalorder %s33, 1
      %p77 = por %p75, %p76
      %p79 = scmp.ne.s32.totalorder %s64, %s78
      %p80 = scmp.eq.s32.totalorder %s33, 0
      %p81 = por %p79, %p80
      %s83 = sadd.s32 %s82, 1
      %p86 = scmp.eq.s32.totalorder %s27, 1
      %p87 = scmp.ne.s32.totalorder %s82, %s84
      %p88 = scmp.eq.s32.totalorder %s27, 0
      %p89 = por %p87, %p88
      %p90 = scmp.ne.s32.totalorder %s82, %s84
      %p91 = scmp.eq.s32.totalorder %s32, 1
      %p92 = por %p90, %p91
      %p93 = scmp.ne.s32.totalorder %s84, %s85
      %p94 = scmp.eq.s32.totalorder %s32, 0
      %p95 = por %p93, %p94
      %p96 = scmp.ne.s32.totalorder %s84, %s85
      %p97 = scmp.eq.s32.totalorder %s33, 1
      %p98 = por %p96, %p97
      %p100 = scmp.ne.s32.totalorder %s85, %s99
      %p101 = scmp.eq.s32.totalorder %s33, 0
      %p102 = por %p100, %p101
      %s104 = sadd.s32 %s103, 1
      %p107 = scmp.eq.s32.totalorder %s27, 1
      %p108 = scmp.ne.s32.totalorder %s103, %s105
      %p109 = scmp.eq.s32.totalorder %s27, 0
      %p110 = por %p108, %p109
      %p111 = scmp.ne.s32.totalorder %s103, %s105
      %p112 = scmp.eq.s32.totalorder %s32, 1
      %p113 = por %p111, %p112
      %p114 = scmp.ne.s32.totalorder %s105, %s106
      %p115 = scmp.eq.s32.totalorder %s32, 0
      %p116 = por %p114, %p115
      %p117 = scmp.ne.s32.totalorder %s105, %s106
      %p118 = scmp.eq.s32.totalorder %s33, 1
      %p119 = por %p117, %p118
      %p121 = scmp.ne.s32.totalorder %s106, %s120
      %p122 = scmp.eq.s32.totalorder %s33, 0
      %p123 = por %p121, %p122
      %s125 = sadd.s32 %s124, 1
      %p128 = scmp.eq.s32.totalorder %s27, 1
      %p129 = scmp.ne.s32.totalorder %s124, %s126
      %p130 = scmp.eq.s32.totalorder %s27, 0
      %p131 = por %p129, %p130
      %p132 = scmp.ne.s32.totalorder %s124, %s126
      %p133 = scmp.eq.s32.totalorder %s32, 1
      %p134 = por %p132, %p133
      %p135 = scmp.ne.s32.totalorder %s126, %s127
      %p136 = scmp.eq.s32.totalorder %s32, 0
      %p137 = por %p135, %p136
      %p138 = scmp.ne.s32.totalorder %s126, %s127
      %p139 = scmp.eq.s32.totalorder %s33, 1
      %p140 = por %p138, %p139
      %p142 = scmp.ne.s32.totalorder %s127, %s141
      %p143 = scmp.eq.s32.totalorder %s33, 0
      %p144 = por %p142, %p143
      %s146 = sadd.s32 %s145, 1
      %p149 = scmp.eq.s32.totalorder %s27, 1
      %p150 = scmp.ne.s32.totalorder %s145, %s147
      %p151 = scmp.eq.s32.totalorder %s27, 0
      %p152 = por %p150, %p151
      %p153 = scmp.ne.s32.totalorder %s145, %s147
      %p154 = scmp.eq.s32.totalorder %s32, 1
      %p155 = por %p153, %p154
      %p156 = scmp.ne.s32.totalorder %s147, %s148
      %p157 = scmp.eq.s32.totalorder %s32, 0
      %p158 = por %p156, %p157
      %p159 = scmp.ne.s32.totalorder %s147, %s148
      %p160 = scmp.eq.s32.totalorder %s33, 1
      %p161 = por %p159, %p160
      %p163 = scmp.ne.s32.totalorder %s148, %s162
      %p164 = scmp.eq.s32.totalorder %s33, 0
      %p165 = por %p163, %p164
      %s167 = sadd.s32 %s166, 1
      %p170 = scmp.eq.s32.totalorder %s27, 1
      %p171 = scmp.ne.s32.totalorder %s166, %s168
      %p172 = scmp.eq.s32.totalorder %s27, 0
      %p173 = por %p171, %p172
      %p174 = scmp.ne.s32.totalorder %s166, %s168
      %p175 = scmp.eq.s32.totalorder %s32, 1
      %p176 = por %p174, %p175
      %p177 = scmp.ne.s32.totalorder %s168, %s169
      %p178 = scmp.eq.s32.totalorder %s32, 0
      %p179 = por %p177, %p178
      %p180 = scmp.ne.s32.totalorder %s168, %s169
      %p181 = scmp.eq.s32.totalorder %s33, 1
      %p182 = por %p180, %p181
      %p184 = scmp.ne.s32.totalorder %s169, %s183
      %p185 = scmp.eq.s32.totalorder %s33, 0
      %p186 = por %p184, %p185
      %s188 = sadd.s32 %s187, 1
      %p191 = scmp.eq.s32.totalorder %s27, 1
      %p192 = scmp.ne.s32.totalorder %s187, %s189
      %p193 = scmp.eq.s32.totalorder %s27, 0
      %p194 = por %p192, %p193
      %p195 = scmp.ne.s32.totalorder %s187, %s189
      %p196 = scmp.eq.s32.totalorder %s32, 1
      %p197 = por %p195, %p196
      %p198 = scmp.ne.s32.totalorder %s189, %s190
      %p199 = scmp.eq.s32.totalorder %s32, 0
      %p200 = por %p198, %p199
      %p201 = scmp.ne.s32.totalorder %s189, %s190
      %p202 = scmp.eq.s32.totalorder %s33, 1
      %p203 = por %p201, %p202
      %p205 = scmp.ne.s32.totalorder %s190, %s204
      %p206 = scmp.eq.s32.totalorder %s33, 0
      %p207 = por %p205, %p206
      %s209 = sadd.s32 %s208, 1
      %p212 = scmp.eq.s32.totalorder %s27, 1
      %p213 = scmp.ne.s32.totalorder %s208, %s210
      %p214 = scmp.eq.s32.totalorder %s27, 0
      %p215 = por %p213, %p214
      %p216 = scmp.ne.s32.totalorder %s208, %s210
      %p217 = scmp.eq.s32.totalorder %s32, 1
      %p218 = por %p216, %p217
      %p219 = scmp.ne.s32.totalorder %s210, %s211
      %p220 = scmp.eq.s32.totalorder %s32, 0
      %p221 = por %p219, %p220
      %p222 = scmp.ne.s32.totalorder %s210, %s211
      %p223 = scmp.eq.s32.totalorder %s33, 1
      %p224 = por %p222, %p223
      %p226 = scmp.ne.s32.totalorder %s211, %s225
      %p227 = scmp.eq.s32.totalorder %s33, 0
      %p228 = por %p226, %p227
      %s230 = sadd.s32 %s229, 1
      %p233 = scmp.eq.s32.totalorder %s27, 1
      %p234 = scmp.ne.s32.totalorder %s229, %s231
      %p235 = scmp.eq.s32.totalorder %s27, 0
      %p236 = por %p234, %p235
      %p237 = scmp.ne.s32.totalorder %s229, %s231
      %p238 = scmp.eq.s32.totalorder %s32, 1
      %p239 = por %p237, %p238
      %p240 = scmp.ne.s32.totalorder %s231, %s232
      %p241 = scmp.eq.s32.totalorder %s32, 0
      %p242 = por %p240, %p241
      %p243 = scmp.ne.s32.totalorder %s231, %s232
      %p244 = scmp.eq.s32.totalorder %s33, 1
      %p245 = por %p243, %p244
      %p247 = scmp.ne.s32.totalorder %s232, %s246
      %p248 = scmp.eq.s32.totalorder %s33, 0
      %p249 = por %p247, %p248
      %s251 = sadd.s32 %s250, 1
      %p254 = scmp.eq.s32.totalorder %s27, 1
      %p255 = scmp.ne.s32.totalorder %s250, %s252
      %p256 = scmp.eq.s32.totalorder %s27, 0
      %p257 = por %p255, %p256
      %p258 = scmp.ne.s32.totalorder %s250, %s252
      %p259 = scmp.eq.s32.totalorder %s32, 1
      %p260 = por %p258, %p259
      %p261 = scmp.ne.s32.totalorder %s252, %s253
      %p262 = scmp.eq.s32.totalorder %s32, 0
      %p263 = por %p261, %p262
      %p264 = scmp.ne.s32.totalorder %s252, %s253
      %p265 = scmp.eq.s32.totalorder %s33, 1
      %p266 = por %p264, %p265
      %p268 = scmp.ne.s32.totalorder %s253, %s267
      %p269 = scmp.eq.s32.totalorder %s33, 0
      %p270 = por %p268, %p269
      %s272 = sadd.s32 %s271, 1
      %p275 = scmp.eq.s32.totalorder %s27, 1
      %p276 = scmp.ne.s32.totalorder %s271, %s273
      %p277 = scmp.eq.s32.totalorder %s27, 0
      %p278 = por %p276, %p277
      %p279 = scmp.ne.s32.totalorder %s271, %s273
      %p280 = scmp.eq.s32.totalorder %s32, 1
      %p281 = por %p279, %p280
      %p282 = scmp.ne.s32.totalorder %s273, %s274
      %p283 = scmp.eq.s32.totalorder %s32, 0
      %p284 = por %p282, %p283
      %p285 = scmp.ne.s32.totalorder %s273, %s274
      %p286 = scmp.eq.s32.totalorder %s33, 1
      %p287 = por %p285, %p286
      %p289 = scmp.ne.s32.totalorder %s274, %s288
      %p290 = scmp.eq.s32.totalorder %s33, 0
      %p291 = por %p289, %p290
      %s293 = sadd.s32 %s292, 1
      %p296 = scmp.eq.s32.totalorder %s27, 1
      %p297 = scmp.ne.s32.totalorder %s292, %s294
      %p298 = scmp.eq.s32.totalorder %s27, 0
      %p299 = por %p297, %p298
      %p300 = scmp.ne.s32.totalorder %s292, %s294
      %p301 = scmp.eq.s32.totalorder %s32, 1
      %p302 = por %p300, %p301
      %p303 = scmp.ne.s32.totalorder %s294, %s295
      %p304 = scmp.eq.s32.totalorder %s32, 0
      %p305 = por %p303, %p304
      %p306 = scmp.ne.s32.totalorder %s294, %s295
      %p307 = scmp.eq.s32.totalorder %s33, 1
      %p308 = por %p306, %p307
      %p310 = scmp.ne.s32.totalorder %s295, %s309
      %p311 = scmp.eq.s32.totalorder %s33, 0
      %p312 = por %p310, %p311
      %s313 = ssub.s32 %s27, %s34
      %p314 = scmp.eq.s32.totalorder %s313, 0
      %s316 = sadd.s32 %s315, 1
      %s317 = scalar_select %p314, %s315, %s316
      %p320 = pneg %p314
      %p321 = scmp.eq.s32.totalorder %s27, 1
      %p322 = por %p320, %p321
      %p323 = scmp.ne.s32.totalorder %s315, %s318
      %p324 = scmp.eq.s32.totalorder %s27, 0
      %p325 = por %p323, %p324
      %p326 = scmp.ne.s32.totalorder %s315, %s318
      %p327 = scmp.eq.s32.totalorder %s32, 1
      %p328 = por %p326, %p327
      %p329 = scmp.ne.s32.totalorder %s318, %s319
      %p330 = scmp.eq.s32.totalorder %s32, 0
      %p331 = por %p329, %p330
      %p332 = scmp.ne.s32.totalorder %s318, %s319
      %p333 = scmp.eq.s32.totalorder %s33, 1
      %p334 = por %p332, %p333
      %p336 = scmp.ne.s32.totalorder %s319, %s335
      %p337 = scmp.eq.s32.totalorder %s33, 0
      %p338 = por %p336, %p337
      %p339 = scmp.le.s32.totalorder 1, %s27
      %p340 = scmp.lt.s32.totalorder %s27, 3
      %p341 = pnand %p339, %p340
      %p342 = pneg %p341
      // Predicated region
      $region9: #{tpu_custom_call.1} parent=5 // pred_check
        _
      $region10: #{tpu_custom_call.1} parent=5 // pred_check_branch
        %344 = sbr.rel (%p341) target = $region12
      $region11: #{tpu_custom_call.1} parent=5 // pred_region
        %s345 = ssub.s32 %s27, 1
        // Predicated region
        $region13: #{tpu_custom_call.1} parent=11 // pred_check
          %p346 = pneg %p74
        $region14: #{tpu_custom_call.1} parent=11 // pred_check_branch
          %348 = sbr.rel (%p346) target = $region16
        $region15: #{tpu_custom_call.1} parent=11 // pred_region
          %s350 = ssub.s32 256, 256
          %351 = vsyncadd [#allocation6], %s350
          %s352 = sshll.u32 [#allocation5], 4
          %s353 = int_to_ptr.vmem [resolvable:$true] %s352
          %358 = dma.hbm_to_vmem [thread:$0]  %s1, 256, %s353, [#allocation6], 64, 64, 4
        $region16: #{tpu_custom_call.1} parent=11 // pred_fallthru
          _
        // Predicated region
        $region17: #{tpu_custom_call.1} parent=11 // pred_check
          %p359 = pneg %p95
        $region18: #{tpu_custom_call.1} parent=11 // pred_check_branch
          %361 = sbr.rel (%p359) target = $region20
        $region19: #{tpu_custom_call.1} parent=11 // pred_region
          %s363 = ssub.s32 256, 256
          %364 = vsyncadd [#allocation6], %s363
          %s365 = sshll.u32 [#allocation7], 4
          %s366 = int_to_ptr.vmem [resolvable:$true] %s365
          %371 = dma.hbm_to_vmem [thread:$0]  %s2, 256, %s366, [#allocation6], 64, 64, 4
        $region20: #{tpu_custom_call.1} parent=11 // pred_fallthru
          _
        // Predicated region
        $region21: #{tpu_custom_call.1} parent=11 // pred_check
          %p372 = pneg %p116
        $region22: #{tpu_custom_call.1} parent=11 // pred_check_branch
          %374 = sbr.rel (%p372) target = $region24
        $region23: #{tpu_custom_call.1} parent=11 // pred_region
          %s376 = ssub.s32 256, 256
          %377 = vsyncadd [#allocation9], %s376
          %s378 = sshll.u32 [#allocation8], 4
          %s379 = int_to_ptr.vmem [resolvable:$true] %s378
          %384 = dma.hbm_to_vmem [thread:$0]  %s3, 256, %s379, [#allocation9], 64, 64, 4
        $region24: #{tpu_custom_call.1} parent=11 // pred_fallthru
          _
        // Predicated region
        $region25: #{tpu_custom_call.1} parent=11 // pred_check
          %p385 = pneg %p137
        $region26: #{tpu_custom_call.1} parent=11 // pred_check_branch
          %387 = sbr.rel (%p385) target = $region28
        $region27: #{tpu_custom_call.1} parent=11 // pred_region
          %s389 = ssub.s32 256, 256
          %390 = vsyncadd [#allocation9], %s389
          %s391 = sshll.u32 [#allocation10], 4
          %s392 = int_to_ptr.vmem [resolvable:$true] %s391
          %397 = dma.hbm_to_vmem [thread:$0]  %s4, 256, %s392, [#allocation9], 64, 64, 4
        $region28: #{tpu_custom_call.1} parent=11 // pred_fallthru
          _
        // Predicated region
        $region29: #{tpu_custom_call.1} parent=11 // pred_check
          %p398 = pneg %p158
        $region30: #{tpu_custom_call.1} parent=11 // pred_check_branch
          %400 = sbr.rel (%p398) target = $region32
        $region31: #{tpu_custom_call.1} parent=11 // pred_region
          _
        $region32: #{tpu_custom_call.1} parent=11 // pred_fallthru
          _
        // Predicated region
        $region33: #{tpu_custom_call.1} parent=11 // pred_check
          %p401 = pneg %p179
        $region34: #{tpu_custom_call.1} parent=11 // pred_check_branch
          %403 = sbr.rel (%p401) target = $region36
        $region35: #{tpu_custom_call.1} parent=11 // pred_region
          _
        $region36: #{tpu_custom_call.1} parent=11 // pred_fallthru
          _
        // Predicated region
        $region37: #{tpu_custom_call.1} parent=11 // pred_check
          %p404 = pneg %p200
        $region38: #{tpu_custom_call.1} parent=11 // pred_check_branch
          %406 = sbr.rel (%p404) target = $region40
        $region39: #{tpu_custom_call.1} parent=11 // pred_region
          _
        $region40: #{tpu_custom_call.1} parent=11 // pred_fallthru
          _
        // Predicated region
        $region41: #{tpu_custom_call.1} parent=11 // pred_check
          %p407 = pneg %p221
        $region42: #{tpu_custom_call.1} parent=11 // pred_check_branch
          %409 = sbr.rel (%p407) target = $region44
        $region43: #{tpu_custom_call.1} parent=11 // pred_region
          _
        $region44: #{tpu_custom_call.1} parent=11 // pred_fallthru
          _
        // Predicated region
        $region45: #{tpu_custom_call.1} parent=11 // pred_check
          %p410 = pneg %p242
        $region46: #{tpu_custom_call.1} parent=11 // pred_check_branch
          %412 = sbr.rel (%p410) target = $region48
        $region47: #{tpu_custom_call.1} parent=11 // pred_region
          _
        $region48: #{tpu_custom_call.1} parent=11 // pred_fallthru
          _
        // Predicated region
        $region49: #{tpu_custom_call.1} parent=11 // pred_check
          %p413 = pneg %p263
        $region50: #{tpu_custom_call.1} parent=11 // pred_check_branch
          %415 = sbr.rel (%p413) target = $region52
        $region51: #{tpu_custom_call.1} parent=11 // pred_region
          _
        $region52: #{tpu_custom_call.1} parent=11 // pred_fallthru
          _
        // Predicated region
        $region53: #{tpu_custom_call.1} parent=11 // pred_check
          %p416 = pneg %p284
        $region54: #{tpu_custom_call.1} parent=11 // pred_check_branch
          %418 = sbr.rel (%p416) target = $region56
        $region55: #{tpu_custom_call.1} parent=11 // pred_region
          _
        $region56: #{tpu_custom_call.1} parent=11 // pred_fallthru
          _
        // Predicated region
        $region57: #{tpu_custom_call.1} parent=11 // pred_check
          %p419 = pneg %p305
        $region58: #{tpu_custom_call.1} parent=11 // pred_check_branch
          %421 = sbr.rel (%p419) target = $region60
        $region59: #{tpu_custom_call.1} parent=11 // pred_region
          _
        $region60: #{tpu_custom_call.1} parent=11 // pred_fallthru
          _
      $region12: #{tpu_custom_call.1} parent=5 // pred_fallthru
        _
      %p422 = scmp.lt.s32.totalorder %s27, 2
      // Predicated region
      $region61: #{tpu_custom_call.1} parent=5 // pred_check
        %p423 = pneg %p422
      $region62: #{tpu_custom_call.1} parent=5 // pred_check_branch
        %425 = sbr.rel (%p423) target = $region64
      $region63: #{tpu_custom_call.1} parent=5 // pred_region
        // Predicated region
        $region65: #{tpu_custom_call.1} parent=63 // pred_check
          %p426 = pneg %p47
        $region66: #{tpu_custom_call.1} parent=63 // pred_check_branch
          %428 = sbr.rel (%p426) target = $region68
        $region67: #{tpu_custom_call.1} parent=63 // pred_region
          %s429 = sand.u32 %s37, 1
          %s430 = scalar_lea.sflag [#allocation3], %s429
          %s431 = sand.u32 %s37, 1
          %s432 = smul.addr %s431, 8
          %s433 = scalar_lea.vmem [#allocation2], %s432
          %s435 = ssub.s32 128, 128
          %436 = vsyncadd %s430, %s435
          %s437 = smul.addr %s27, 128
          %s438 = scalar_lea.hbm %s0, %s437
          %s440 = sshll.u32 %s433, 4
          %s441 = int_to_ptr.vmem [resolvable:$true] %s440
          %443 = dma.hbm_to_vmem [thread:$0]  %s438, 128, %s441, %s430
        $region68: #{tpu_custom_call.1} parent=63 // pred_fallthru
          _
      $region64: #{tpu_custom_call.1} parent=5 // pred_fallthru
        _
      %p444 = scmp.le.s32.totalorder 1, %s27
      %p445 = scmp.lt.s32.totalorder %s27, 3
      %p446 = pnand %p444, %p445
      %p447 = pneg %p446
      // Predicated region
      $region69: #{tpu_custom_call.1} parent=5 // pred_check
        _
      $region70: #{tpu_custom_call.1} parent=5 // pred_check_branch
        %449 = sbr.rel (%p446) target = $region72
      $region71: #{tpu_custom_call.1} parent=5 // pred_region
        %s450 = ssub.s32 %s27, 1
        %s451 = sand.u32 %s40, 1
        %s452 = scalar_lea.sflag [#allocation3], %s451
        %s453 = sand.u32 %s40, 1
        %s454 = smul.addr %s453, 8
        %s455 = scalar_lea.vmem [#allocation2], %s454
        // Predicated region
        $region73: #{tpu_custom_call.1} parent=71 // pred_check
          %p456 = pneg %p53
        $region74: #{tpu_custom_call.1} parent=71 // pred_check_branch
          %458 = sbr.rel (%p456) target = $region76
        $region75: #{tpu_custom_call.1} parent=71 // pred_region
          %459 = dma.done %s452, 128
        $region76: #{tpu_custom_call.1} parent=71 // pred_fallthru
          _
        // Predicated region
        $region77: #{tpu_custom_call.1} parent=71 // pred_check
          %p460 = pneg %p74
        $region78: #{tpu_custom_call.1} parent=71 // pred_check_branch
          %462 = sbr.rel (%p460) target = $region80
        $region79: #{tpu_custom_call.1} parent=71 // pred_region
          %463 = dma.done [#allocation6], 256
        $region80: #{tpu_custom_call.1} parent=71 // pred_fallthru
          _
        // Predicated region
        $region81: #{tpu_custom_call.1} parent=71 // pred_check
          %p464 = pneg %p95
        $region82: #{tpu_custom_call.1} parent=71 // pred_check_branch
          %466 = sbr.rel (%p464) target = $region84
        $region83: #{tpu_custom_call.1} parent=71 // pred_region
          %467 = dma.done [#allocation6], 256
        $region84: #{tpu_custom_call.1} parent=71 // pred_fallthru
          _
        // Predicated region
        $region85: #{tpu_custom_call.1} parent=71 // pred_check
          %p468 = pneg %p116
        $region86: #{tpu_custom_call.1} parent=71 // pred_check_branch
          %470 = sbr.rel (%p468) target = $region88
        $region87: #{tpu_custom_call.1} parent=71 // pred_region
          %471 = dma.done [#allocation9], 256
        $region88: #{tpu_custom_call.1} parent=71 // pred_fallthru
          _
        // Predicated region
        $region89: #{tpu_custom_call.1} parent=71 // pred_check
          %p472 = pneg %p137
        $region90: #{tpu_custom_call.1} parent=71 // pred_check_branch
          %474 = sbr.rel (%p472) target = $region92
        $region91: #{tpu_custom_call.1} parent=71 // pred_region
          %475 = dma.done [#allocation9], 256
        $region92: #{tpu_custom_call.1} parent=71 // pred_fallthru
          _
        %s476 = sand.u32 %s40, 1
        %s477 = scalar_lea.sflag [#allocation3], %s476
        %s478 = sand.u32 %s40, 1
        %s479 = smul.addr %s478, 8
        %s480 = scalar_lea.vmem [#allocation2], %s479
        %p481 = pneg %p53
        %p482 = pneg %p50
        %p483 = pneg %p74
        %p484 = pneg %p71
        %p485 = pneg %p95
        %p486 = pneg %p92
        %p487 = pneg %p116
        %p488 = pneg %p113
        %p489 = pneg %p137
        %p490 = pneg %p134
        %p491 = pneg %p158
        %p492 = pneg %p155
        %p493 = pneg %p179
        %p494 = pneg %p176
        %p495 = pneg %p200
        %p496 = pneg %p197
        %p497 = pneg %p221
        %p498 = pneg %p218
        %p499 = pneg %p242
        %p500 = pneg %p239
        %p501 = pneg %p263
        %p502 = pneg %p260
        %p503 = pneg %p284
        %p504 = pneg %p281
        %p505 = pneg %p305
        %p506 = pneg %p302
        %p507 = pneg %p331
        %p508 = pneg %p328
        %s509 = sand.u32 %s318, 1
        %s510 = scalar_lea.sflag [#allocation4], %s509
        %s511 = sand.u32 %s318, 1
        %s512 = smul.addr %s511, 8
        %s513 = scalar_lea.vmem [#allocation11], %s512
        %v515 = vld [vmem:[%s455] sm:$0xff]
        %v516 = vpack.c.bf16 %v515, %v515
        %v517 = vld [vmem:[#allocation5] sm:$0xf]
        %v518 = vld [vmem:[#allocation5 + $0x4] sm:$0xf]
        %v519 = vld [vmem:[#allocation5 + $0x8] sm:$0xf]
        %v520 = vld [vmem:[#allocation5 + $0xc] sm:$0xf]
        %v521 = vld [vmem:[%s5] sm:$0x1]
        %v523 = vlaneseq
        %v524 = vshrl.u32 %v523, 7
        %v525 = vsub.s32 0, %v524
        %v526 = vrot.slane %v521, %v525
        %v532 = vunpack.c.l.b16 %v517
        %v533 = vunpack.c.l.b16 %v518
        %v534 = vunpack.c.l.b16 %v519
        %v535 = vunpack.c.l.b16 %v520
        %v536 = vpack.c.b16 %v533, %v532
        %v537 = vpack.c.b16 %v535, %v534
        %vm540 = vcmask 261120
        %v542 = vsel %vm540, %v516, 0
        %544 = vmatprep.subr.bf16.mxu0 0
        %545 = vmatpush1.bf16.msra.mxu0 %v536
        %546 = vmatprep.subr.bf16.mxu0 0
        %547 = vmatpush1.bf16.msra.mxu0 %v537
        %548 = vmatprep.subr.bf16.mxu0 0
        %549 = vmatpush1.bf16.msra.mxu0 0
        %550 = vmatprep.subr.bf16.mxu0 0
        %551 = vmatpush1.bf16.msra.mxu0 0
        %552 = vmatprep.subr.bf16.mxu0 0
        %553 = vmatpush1.bf16.msra.mxu0 0
        %554 = vmatprep.subr.bf16.mxu0 0
        %555 = vmatpush1.bf16.msra.mxu0 0
        %556 = vmatprep.subr.bf16.mxu0 0
        %557 = vmatpush1.bf16.msra.mxu0 0
        %558 = vmatprep.subr.bf16.mxu0 0
        %559 = vmatpush1.bf16.msra.mxu0 0
        %560 = vmatprep.subr.bf16.mxu0 0
        %561 = vmatpush1.bf16.msra.mxu0 0
        %562 = vmatprep.subr.bf16.mxu0 0
        %563 = vmatpush1.bf16.msra.mxu0 0
        %564 = vmatprep.subr.bf16.mxu0 0
        %565 = vmatpush1.bf16.msra.mxu0 0
        %566 = vmatprep.subr.bf16.mxu0 0
        %567 = vmatpush1.bf16.msra.mxu0 0
        %568 = vmatprep.subr.bf16.mxu0 0
        %569 = vmatpush1.bf16.msra.mxu0 0
        %570 = vmatprep.subr.bf16.mxu0 0
        %571 = vmatpush1.bf16.msra.mxu0 0
        %572 = vmatprep.subr.bf16.mxu0 0
        %573 = vmatpush1.bf16.msra.mxu0 0
        %574 = vmatprep.subr.bf16.mxu0 0
        %575 = vmatpush1.bf16.msra.mxu0 0
        %576 = vmatprep.mubr.bf16.mxu0 0
        %577 = vmatmul.mubr.bf16.gmra.mrb[0].mxu0 %v542
        %v578 = vpop.f32.mrb[0].mxu0
        %v579 = vadd.f32 %v526, %v578
        %v580 = vpop.f32.mrb[0].mxu0
        %v581 = vpop.f32.mrb[0].mxu0
        %v582 = vpop.f32.mrb[0].mxu0
        %583 = vdwg.mxu0
        %v584 = vld [vmem:[#allocation7] sm:$0xf]
        %v585 = vld [vmem:[#allocation7 + $0x4] sm:$0xf]
        %v586 = vld [vmem:[#allocation7 + $0x8] sm:$0xf]
        %v587 = vld [vmem:[#allocation7 + $0xc] sm:$0xf]
        %v588 = vld [vmem:[%s6] sm:$0x1]
        %v590 = vlaneseq
        %v591 = vshrl.u32 %v590, 7
        %v592 = vsub.s32 0, %v591
        %v593 = vrot.slane %v588, %v592
        %v599 = vunpack.c.l.b16 %v584
        %v600 = vunpack.c.l.b16 %v585
        %v601 = vunpack.c.l.b16 %v586
        %v602 = vunpack.c.l.b16 %v587
        %v603 = vpack.c.b16 %v600, %v599
        %v604 = vpack.c.b16 %v602, %v601
        %607 = vmatprep.subr.bf16.mxu0 0
        %608 = vmatpush1.bf16.msra.mxu0 %v603
        %609 = vmatprep.subr.bf16.mxu0 0
        %610 = vmatpush1.bf16.msra.mxu0 %v604
        %611 = vmatprep.subr.bf16.mxu0 0
        %612 = vmatpush1.bf16.msra.mxu0 0
        %613 = vmatprep.subr.bf16.mxu0 0
        %614 = vmatpush1.bf16.msra.mxu0 0
        %615 = vmatprep.subr.bf16.mxu0 0
        %616 = vmatpush1.bf16.msra.mxu0 0
        %617 = vmatprep.subr.bf16.mxu0 0
        %618 = vmatpush1.bf16.msra.mxu0 0
        %619 = vmatprep.subr.bf16.mxu0 0
        %620 = vmatpush1.bf16.msra.mxu0 0
        %621 = vmatprep.subr.bf16.mxu0 0
        %622 = vmatpush1.bf16.msra.mxu0 0
        %623 = vmatprep.subr.bf16.mxu0 0
        %624 = vmatpush1.bf16.msra.mxu0 0
        %625 = vmatprep.subr.bf16.mxu0 0
        %626 = vmatpush1.bf16.msra.mxu0 0
        %627 = vmatprep.subr.bf16.mxu0 0
        %628 = vmatpush1.bf16.msra.mxu0 0
        %629 = vmatprep.subr.bf16.mxu0 0
        %630 = vmatpush1.bf16.msra.mxu0 0
        %631 = vmatprep.subr.bf16.mxu0 0
        %632 = vmatpush1.bf16.msra.mxu0 0
        %633 = vmatprep.subr.bf16.mxu0 0
        %634 = vmatpush1.bf16.msra.mxu0 0
        %635 = vmatprep.subr.bf16.mxu0 0
        %636 = vmatpush1.bf16.msra.mxu0 0
        %637 = vmatprep.subr.bf16.mxu0 0
        %638 = vmatpush1.bf16.msra.mxu0 0
        %639 = vmatprep.mubr.bf16.mxu0 0
        %640 = vmatmul.mubr.bf16.gmra.mrb[0].mxu0 %v542
        %v641 = vpop.f32.mrb[0].mxu0
        %v642 = vadd.f32 %v593, %v641
        %v643 = vpop.f32.mrb[0].mxu0
        %v644 = vpop.f32.mrb[0].mxu0
        %v645 = vpop.f32.mrb[0].mxu0
        %646 = vdwg.mxu0
        %v647 = vld [vmem:[#allocation8] sm:$0xf]
        %v648 = vld [vmem:[#allocation8 + $0x4] sm:$0xf]
        %v649 = vld [vmem:[#allocation8 + $0x8] sm:$0xf]
        %v650 = vld [vmem:[#allocation8 + $0xc] sm:$0xf]
        %v651 = vld [vmem:[%s7] sm:$0x1]
        %v653 = vlaneseq
        %v654 = vshrl.u32 %v653, 7
        %v655 = vsub.s32 0, %v654
        %v656 = vrot.slane %v651, %v655
        %v662 = vunpack.c.l.b16 %v647
        %v663 = vunpack.c.l.b16 %v648
        %v664 = vunpack.c.l.b16 %v649
        %v665 = vunpack.c.l.b16 %v650
        %v666 = vpack.c.b16 %v663, %v662
        %v667 = vpack.c.b16 %v665, %v664
        %670 = vmatprep.subr.bf16.mxu0 0
        %671 = vmatpush1.bf16.msra.mxu0 %v666
        %672 = vmatprep.subr.bf16.mxu0 0
        %673 = vmatpush1.bf16.msra.mxu0 %v667
        %674 = vmatprep.subr.bf16.mxu0 0
        %675 = vmatpush1.bf16.msra.mxu0 0
        %676 = vmatprep.subr.bf16.mxu0 0
        %677 = vmatpush1.bf16.msra.mxu0 0
        %678 = vmatprep.subr.bf16.mxu0 0
        %679 = vmatpush1.bf16.msra.mxu0 0
        %680 = vmatprep.subr.bf16.mxu0 0
        %681 = vmatpush1.bf16.msra.mxu0 0
        %682 = vmatprep.subr.bf16.mxu0 0
        %683 = vmatpush1.bf16.msra.mxu0 0
        %684 = vmatprep.subr.bf16.mxu0 0
        %685 = vmatpush1.bf16.msra.mxu0 0
        %686 = vmatprep.subr.bf16.mxu0 0
        %687 = vmatpush1.bf16.msra.mxu0 0
        %688 = vmatprep.subr.bf16.mxu0 0
        %689 = vmatpush1.bf16.msra.mxu0 0
        %690 = vmatprep.subr.bf16.mxu0 0
        %691 = vmatpush1.bf16.msra.mxu0 0
        %692 = vmatprep.subr.bf16.mxu0 0
        %693 = vmatpush1.bf16.msra.mxu0 0
        %694 = vmatprep.subr.bf16.mxu0 0
        %695 = vmatpush1.bf16.msra.mxu0 0
        %696 = vmatprep.subr.bf16.mxu0 0
        %697 = vmatpush1.bf16.msra.mxu0 0
        %698 = vmatprep.subr.bf16.mxu0 0
        %699 = vmatpush1.bf16.msra.mxu0 0
        %700 = vmatprep.subr.bf16.mxu0 0
        %701 = vmatpush1.bf16.msra.mxu0 0
        %702 = vmatprep.mubr.bf16.mxu0 0
        %703 = vmatmul.mubr.bf16.gmra.mrb[0].mxu0 %v542
        %v704 = vpop.f32.mrb[0].mxu0
        %v705 = vadd.f32 %v656, %v704
        %v706 = vpop.f32.mrb[0].mxu0
        %v707 = vpop.f32.mrb[0].mxu0
        %v708 = vpop.f32.mrb[0].mxu0
        %709 = vdwg.mxu0
        %v710 = vpack.c.bf16 %v579, %v579
        %v711 = vpack.c.bf16 %v642, %v642
        %v712 = vpack.c.bf16 %v705, %v705
        %vm713 = vcmask 64512
        %v715 = vsel %vm713, %v710, 0
        %v718 = vsel %vm713, %v711, 0
        %720 = vmatprep.subr.bf16.mxu0 0
        %721 = vmatpush1.bf16.xpose.msra.mxu0 %v718
        %722 = vmatprep.subr.bf16.mxu0 0
        %723 = vmatpush1.bf16.xpose.msra.mxu0 0
        %724 = vmatprep.subr.bf16.mxu0 0
        %725 = vmatpush1.bf16.xpose.msra.mxu0 0
        %726 = vmatprep.subr.bf16.mxu0 0
        %727 = vmatpush1.bf16.xpose.msra.mxu0 0
        %728 = vmatprep.subr.bf16.mxu0 0
        %729 = vmatpush1.bf16.xpose.msra.mxu0 0
        %730 = vmatprep.subr.bf16.mxu0 0
        %731 = vmatpush1.bf16.xpose.msra.mxu0 0
        %732 = vmatprep.subr.bf16.mxu0 0
        %733 = vmatpush1.bf16.xpose.msra.mxu0 0
        %734 = vmatprep.subr.bf16.mxu0 0
        %735 = vmatpush1.bf16.xpose.msra.mxu0 0
        %736 = vmatprep.subr.bf16.mxu0 0
        %737 = vmatpush1.bf16.xpose.msra.mxu0 0
        %738 = vmatprep.subr.bf16.mxu0 0
        %739 = vmatpush1.bf16.xpose.msra.mxu0 0
        %740 = vmatprep.subr.bf16.mxu0 0
        %741 = vmatpush1.bf16.xpose.msra.mxu0 0
        %742 = vmatprep.subr.bf16.mxu0 0
        %743 = vmatpush1.bf16.xpose.msra.mxu0 0
        %744 = vmatprep.subr.bf16.mxu0 0
        %745 = vmatpush1.bf16.xpose.msra.mxu0 0
        %746 = vmatprep.subr.bf16.mxu0 0
        %747 = vmatpush1.bf16.xpose.msra.mxu0 0
        %748 = vmatprep.subr.bf16.mxu0 0
        %749 = vmatpush1.bf16.xpose.msra.mxu0 0
        %750 = vmatprep.subr.bf16.mxu0 0
        %751 = vmatpush1.bf16.xpose.msra.mxu0 0
        %752 = vmatprep.mubr.bf16.mxu0 0
        %753 = vmatmul.mubr.bf16.gmra.mrb[0].mxu0 %v715
        %v754 = vpop.f32.mrb[0].mxu0
        %v755 = vadd.f32 0.0, %v754
        %v756 = vpop.f32.mrb[0].mxu0
        %v757 = vpop.f32.mrb[0].mxu0
        %v758 = vpop.f32.mrb[0].mxu0
        %759 = vdwg.mxu0
        %v760 = vsel %vm713, %v755, -inf
        %761 = vmax.xlane.f32.xlu0 %v760
        %v762 = vpop.xlane.xlu0 %761
        %v763 = vsub.f32 %v755, %v762
        %v764 = vmul.f32 %v763, 1.442695
        %v765 = vpow.pop %v764
        %v766 = vsel %vm713, %v765, 0.0
        %767 = vadd.xlane.f32.xlu0 %v766
        %v768 = vpop.xlane.xlu0 %767
        %v769 = vpack.c.bf16 %v765, %v765
        %v771 = vsel %vm713, %v769, 0
        %vm773 = vcmask 1043456
        %v775 = vsel %vm773, %v712, 0
        %777 = vmatprep.subr.bf16.mxu0 0
        %778 = vmatpush1.bf16.msra.mxu0 %v775
        %779 = vmatprep.subr.bf16.mxu0 0
        %780 = vmatpush1.bf16.msra.mxu0 0
        %781 = vmatprep.subr.bf16.mxu0 0
        %782 = vmatpush1.bf16.msra.mxu0 0
        %783 = vmatprep.subr.bf16.mxu0 0
        %784 = vmatpush1.bf16.msra.mxu0 0
        %785 = vmatprep.subr.bf16.mxu0 0
        %786 = vmatpush1.bf16.msra.mxu0 0
        %787 = vmatprep.subr.bf16.mxu0 0
        %788 = vmatpush1.bf16.msra.mxu0 0
        %789 = vmatprep.subr.bf16.mxu0 0
        %790 = vmatpush1.bf16.msra.mxu0 0
        %791 = vmatprep.subr.bf16.mxu0 0
        %792 = vmatpush1.bf16.msra.mxu0 0
        %793 = vmatprep.subr.bf16.mxu0 0
        %794 = vmatpush1.bf16.msra.mxu0 0
        %795 = vmatprep.subr.bf16.mxu0 0
        %796 = vmatpush1.bf16.msra.mxu0 0
        %797 = vmatprep.subr.bf16.mxu0 0
        %798 = vmatpush1.bf16.msra.mxu0 0
        %799 = vmatprep.subr.bf16.mxu0 0
        %800 = vmatpush1.bf16.msra.mxu0 0
        %801 = vmatprep.subr.bf16.mxu0 0
        %802 = vmatpush1.bf16.msra.mxu0 0
        %803 = vmatprep.subr.bf16.mxu0 0
        %804 = vmatpush1.bf16.msra.mxu0 0
        %805 = vmatprep.subr.bf16.mxu0 0
        %806 = vmatpush1.bf16.msra.mxu0 0
        %807 = vmatprep.subr.bf16.mxu0 0
        %808 = vmatpush1.bf16.msra.mxu0 0
        %809 = vmatprep.mubr.bf16.mxu0 0
        %810 = vmatmul.mubr.bf16.gmra.mrb[0].mxu0 %v771
        %v811 = vpop.f32.mrb[0].mxu0
        %v812 = vadd.f32 0.0, %v811
        %v813 = vpop.f32.mrb[0].mxu0
        %v814 = vpop.f32.mrb[0].mxu0
        %v815 = vpop.f32.mrb[0].mxu0
        %816 = vdwg.mxu0
        %v817 = vrcp.pop %v768
        %v818 = vmul.f32 %v812, %v817
        %820 = vrot.lane.b32.xlu0 %v710, 120
        %v821 = vpop.permute.xlu0 %820
        %823 = vrot.lane.b32.xlu0 %v711, 120
        %v824 = vpop.permute.xlu0 %823
        %v826 = vsel %vm713, %v821, 0
        %v829 = vsel %vm713, %v824, 0
        %831 = vmatprep.subr.bf16.mxu0 0
        %832 = vmatpush1.bf16.xpose.msra.mxu0 %v829
        %833 = vmatprep.subr.bf16.mxu0 0
        %834 = vmatpush1.bf16.xpose.msra.mxu0 0
        %835 = vmatprep.subr.bf16.mxu0 0
        %836 = vmatpush1.bf16.xpose.msra.mxu0 0
        %837 = vmatprep.subr.bf16.mxu0 0
        %838 = vmatpush1.bf16.xpose.msra.mxu0 0
        %839 = vmatprep.subr.bf16.mxu0 0
        %840 = vmatpush1.bf16.xpose.msra.mxu0 0
        %841 = vmatprep.subr.bf16.mxu0 0
        %842 = vmatpush1.bf16.xpose.msra.mxu0 0
        %843 = vmatprep.subr.bf16.mxu0 0
        %844 = vmatpush1.bf16.xpose.msra.mxu0 0
        %845 = vmatprep.subr.bf16.mxu0 0
        %846 = vmatpush1.bf16.xpose.msra.mxu0 0
        %847 = vmatprep.subr.bf16.mxu0 0
        %848 = vmatpush1.bf16.xpose.msra.mxu0 0
        %849 = vmatprep.subr.bf16.mxu0 0
        %850 = vmatpush1.bf16.xpose.msra.mxu0 0
        %851 = vmatprep.subr.bf16.mxu0 0
        %852 = vmatpush1.bf16.xpose.msra.mxu0 0
        %853 = vmatprep.subr.bf16.mxu0 0
        %854 = vmatpush1.bf16.xpose.msra.mxu0 0
        %855 = vmatprep.subr.bf16.mxu0 0
        %856 = vmatpush1.bf16.xpose.msra.mxu0 0
        %857 = vmatprep.subr.bf16.mxu0 0
        %858 = vmatpush1.bf16.xpose.msra.mxu0 0
        %859 = vmatprep.subr.bf16.mxu0 0
        %860 = vmatpush1.bf16.xpose.msra.mxu0 0
        %861 = vmatprep.subr.bf16.mxu0 0
        %862 = vmatpush1.bf16.xpose.msra.mxu0 0
        %863 = vmatprep.mubr.bf16.mxu0 0
        %864 = vmatmul.mubr.bf16.gmra.mrb[0].mxu0 %v826
        %v865 = vpop.f32.mrb[0].mxu0
        %v866 = vadd.f32 0.0, %v865
        %v867 = vpop.f32.mrb[0].mxu0
        %v868 = vpop.f32.mrb[0].mxu0
        %v869 = vpop.f32.mrb[0].mxu0
        %870 = vdwg.mxu0
        %v871 = vsel %vm713, %v866, -inf
        %872 = vmax.xlane.f32.xlu0 %v871
        %v873 = vpop.xlane.xlu0 %872
        %v874 = vsub.f32 %v866, %v873
        %v875 = vmul.f32 %v874, 1.442695
        %v876 = vpow.pop %v875
        %v877 = vsel %vm713, %v876, 0.0
        %878 = vadd.xlane.f32.xlu0 %v877
        %v879 = vpop.xlane.xlu0 %878
        %v880 = vpack.c.bf16 %v876, %v876
        %882 = vrot.lane.b32.xlu0 %v712, 120
        %v883 = vpop.permute.xlu0 %882
        %v885 = vsel %vm713, %v880, 0
        %v888 = vsel %vm773, %v883, 0
        %890 = vmatprep.subr.bf16.mxu0 0
        %891 = vmatpush1.bf16.msra.mxu0 %v888
        %892 = vmatprep.subr.bf16.mxu0 0
        %893 = vmatpush1.bf16.msra.mxu0 0
        %894 = vmatprep.subr.bf16.mxu0 0
        %895 = vmatpush1.bf16.msra.mxu0 0
        %896 = vmatprep.subr.bf16.mxu0 0
        %897 = vmatpush1.bf16.msra.mxu0 0
        %898 = vmatprep.subr.bf16.mxu0 0
        %899 = vmatpush1.bf16.msra.mxu0 0
        %900 = vmatprep.subr.bf16.mxu0 0
        %901 = vmatpush1.bf16.msra.mxu0 0
        %902 = vmatprep.subr.bf16.mxu0 0
        %903 = vmatpush1.bf16.msra.mxu0 0
        %904 = vmatprep.subr.bf16.mxu0 0
        %905 = vmatpush1.bf16.msra.mxu0 0
        %906 = vmatprep.subr.bf16.mxu0 0
        %907 = vmatpush1.bf16.msra.mxu0 0
        %908 = vmatprep.subr.bf16.mxu0 0
        %909 = vmatpush1.bf16.msra.mxu0 0
        %910 = vmatprep.subr.bf16.mxu0 0
        %911 = vmatpush1.bf16.msra.mxu0 0
        %912 = vmatprep.subr.bf16.mxu0 0
        %913 = vmatpush1.bf16.msra.mxu0 0
        %914 = vmatprep.subr.bf16.mxu0 0
        %915 = vmatpush1.bf16.msra.mxu0 0
        %916 = vmatprep.subr.bf16.mxu0 0
        %917 = vmatpush1.bf16.msra.mxu0 0
        %918 = vmatprep.subr.bf16.mxu0 0
        %919 = vmatpush1.bf16.msra.mxu0 0
        %920 = vmatprep.subr.bf16.mxu0 0
        %921 = vmatpush1.bf16.msra.mxu0 0
        %922 = vmatprep.mubr.bf16.mxu0 0
        %923 = vmatmul.mubr.bf16.gmra.mrb[0].mxu0 %v885
        %v924 = vpop.f32.mrb[0].mxu0
        %v925 = vadd.f32 0.0, %v924
        %v926 = vpop.f32.mrb[0].mxu0
        %v927 = vpop.f32.mrb[0].mxu0
        %v928 = vpop.f32.mrb[0].mxu0
        %929 = vdwg.mxu0
        %v930 = vrcp.pop %v879
        %v931 = vmul.f32 %v925, %v930
        %932 = vrot.lane.b32.xlu0 %v710, 112
        %v933 = vpop.permute.xlu0 %932
        %934 = vrot.lane.b32.xlu0 %v711, 112
        %v935 = vpop.permute.xlu0 %934
        %v937 = vsel %vm713, %v933, 0
        %v940 = vsel %vm713, %v935, 0
        %942 = vmatprep.subr.bf16.mxu0 0
        %943 = vmatpush1.bf16.xpose.msra.mxu0 %v940
        %944 = vmatprep.subr.bf16.mxu0 0
        %945 = vmatpush1.bf16.xpose.msra.mxu0 0
        %946 = vmatprep.subr.bf16.mxu0 0
        %947 = vmatpush1.bf16.xpose.msra.mxu0 0
        %948 = vmatprep.subr.bf16.mxu0 0
        %949 = vmatpush1.bf16.xpose.msra.mxu0 0
        %950 = vmatprep.subr.bf16.mxu0 0
        %951 = vmatpush1.bf16.xpose.msra.mxu0 0
        %952 = vmatprep.subr.bf16.mxu0 0
        %953 = vmatpush1.bf16.xpose.msra.mxu0 0
        %954 = vmatprep.subr.bf16.mxu0 0
        %955 = vmatpush1.bf16.xpose.msra.mxu0 0
        %956 = vmatprep.subr.bf16.mxu0 0
        %957 = vmatpush1.bf16.xpose.msra.mxu0 0
        %958 = vmatprep.subr.bf16.mxu0 0
        %959 = vmatpush1.bf16.xpose.msra.mxu0 0
        %960 = vmatprep.subr.bf16.mxu0 0
        %961 = vmatpush1.bf16.xpose.msra.mxu0 0
        %962 = vmatprep.subr.bf16.mxu0 0
        %963 = vmatpush1.bf16.xpose.msra.mxu0 0
        %964 = vmatprep.subr.bf16.mxu0 0
        %965 = vmatpush1.bf16.xpose.msra.mxu0 0
        %966 = vmatprep.subr.bf16.mxu0 0
        %967 = vmatpush1.bf16.xpose.msra.mxu0 0
        %968 = vmatprep.subr.bf16.mxu0 0
        %969 = vmatpush1.bf16.xpose.msra.mxu0 0
        %970 = vmatprep.subr.bf16.mxu0 0
        %971 = vmatpush1.bf16.xpose.msra.mxu0 0
        %972 = vmatprep.subr.bf16.mxu0 0
        %973 = vmatpush1.bf16.xpose.msra.mxu0 0
        %974 = vmatprep.mubr.bf16.mxu0 0
        %975 = vmatmul.mubr.bf16.gmra.mrb[0].mxu0 %v937
        %v976 = vpop.f32.mrb[0].mxu0
        %v977 = vadd.f32 0.0, %v976
        %v978 = vpop.f32.mrb[0].mxu0
        %v979 = vpop.f32.mrb[0].mxu0
        %v980 = vpop.f32.mrb[0].mxu0
        %981 = vdwg.mxu0
        %v982 = vsel %vm713, %v977, -inf
        %983 = vmax.xlane.f32.xlu0 %v982
        %v984 = vpop.xlane.xlu0 %983
        %v985 = vsub.f32 %v977, %v984
        %v986 = vmul.f32 %v985, 1.442695
        %v987 = vpow.pop %v986
        %v988 = vsel %vm713, %v987, 0.0
        %989 = vadd.xlane.f32.xlu0 %v988
        %v990 = vpop.xlane.xlu0 %989
        %v991 = vpack.c.bf16 %v987, %v987
        %992 = vrot.lane.b32.xlu0 %v712, 112
        %v993 = vpop.permute.xlu0 %992
        %v995 = vsel %vm713, %v991, 0
        %v998 = vsel %vm773, %v993, 0
        %1000 = vmatprep.subr.bf16.mxu0 0
        %1001 = vmatpush1.bf16.msra.mxu0 %v998
        %1002 = vmatprep.subr.bf16.mxu0 0
        %1003 = vmatpush1.bf16.msra.mxu0 0
        %1004 = vmatprep.subr.bf16.mxu0 0
        %1005 = vmatpush1.bf16.msra.mxu0 0
        %1006 = vmatprep.subr.bf16.mxu0 0
        %1007 = vmatpush1.bf16.msra.mxu0 0
        %1008 = vmatprep.subr.bf16.mxu0 0
        %1009 = vmatpush1.bf16.msra.mxu0 0
        %1010 = vmatprep.subr.bf16.mxu0 0
        %1011 = vmatpush1.bf16.msra.mxu0 0
        %1012 = vmatprep.subr.bf16.mxu0 0
        %1013 = vmatpush1.bf16.msra.mxu0 0
        %1014 = vmatprep.subr.bf16.mxu0 0
        %1015 = vmatpush1.bf16.msra.mxu0 0
        %1016 = vmatprep.subr.bf16.mxu0 0
        %1017 = vmatpush1.bf16.msra.mxu0 0
        %1018 = vmatprep.subr.bf16.mxu0 0
        %1019 = vmatpush1.bf16.msra.mxu0 0
        %1020 = vmatprep.subr.bf16.mxu0 0
        %1021 = vmatpush1.bf16.msra.mxu0 0
        %1022 = vmatprep.subr.bf16.mxu0 0
        %1023 = vmatpush1.bf16.msra.mxu0 0
        %1024 = vmatprep.subr.bf16.mxu0 0
        %1025 = vmatpush1.bf16.msra.mxu0 0
        %1026 = vmatprep.subr.bf16.mxu0 0
        %1027 = vmatpush1.bf16.msra.mxu0 0
        %1028 = vmatprep.subr.bf16.mxu0 0
        %1029 = vmatpush1.bf16.msra.mxu0 0
        %1030 = vmatprep.subr.bf16.mxu0 0
        %1031 = vmatpush1.bf16.msra.mxu0 0
        %1032 = vmatprep.mubr.bf16.mxu0 0
        %1033 = vmatmul.mubr.bf16.gmra.mrb[0].mxu0 %v995
        %v1034 = vpop.f32.mrb[0].mxu0
        %v1035 = vadd.f32 0.0, %v1034
        %v1036 = vpop.f32.mrb[0].mxu0
        %v1037 = vpop.f32.mrb[0].mxu0
        %v1038 = vpop.f32.mrb[0].mxu0
        %1039 = vdwg.mxu0
        %v1040 = vrcp.pop %v990
        %v1041 = vmul.f32 %v1035, %v1040
        %1042 = vrot.lane.b32.xlu0 %v710, 104
        %v1043 = vpop.permute.xlu0 %1042
        %1044 = vrot.lane.b32.xlu0 %v711, 104
        %v1045 = vpop.permute.xlu0 %1044
        %v1047 = vsel %vm713, %v1043, 0
        %v1050 = vsel %vm713, %v1045, 0
        %1052 = vmatprep.subr.bf16.mxu0 0
        %1053 = vmatpush1.bf16.xpose.msra.mxu0 %v1050
        %1054 = vmatprep.subr.bf16.mxu0 0
        %1055 = vmatpush1.bf16.xpose.msra.mxu0 0
        %1056 = vmatprep.subr.bf16.mxu0 0
        %1057 = vmatpush1.bf16.xpose.msra.mxu0 0
        %1058 = vmatprep.subr.bf16.mxu0 0
        %1059 = vmatpush1.bf16.xpose.msra.mxu0 0
        %1060 = vmatprep.subr.bf16.mxu0 0
        %1061 = vmatpush1.bf16.xpose.msra.mxu0 0
        %1062 = vmatprep.subr.bf16.mxu0 0
        %1063 = vmatpush1.bf16.xpose.msra.mxu0 0
        %1064 = vmatprep.subr.bf16.mxu0 0
        %1065 = vmatpush1.bf16.xpose.msra.mxu0 0
        %1066 = vmatprep.subr.bf16.mxu0 0
        %1067 = vmatpush1.bf16.xpose.msra.mxu0 0
        %1068 = vmatprep.subr.bf16.mxu0 0
        %1069 = vmatpush1.bf16.xpose.msra.mxu0 0
        %1070 = vmatprep.subr.bf16.mxu0 0
        %1071 = vmatpush1.bf16.xpose.msra.mxu0 0
        %1072 = vmatprep.subr.bf16.mxu0 0
        %1073 = vmatpush1.bf16.xpose.msra.mxu0 0
        %1074 = vmatprep.subr.bf16.mxu0 0
        %1075 = vmatpush1.bf16.xpose.msra.mxu0 0
        %1076 = vmatprep.subr.bf16.mxu0 0
        %1077 = vmatpush1.bf16.xpose.msra.mxu0 0
        %1078 = vmatprep.subr.bf16.mxu0 0
        %1079 = vmatpush1.bf16.xpose.msra.mxu0 0
        %1080 = vmatprep.subr.bf16.mxu0 0
        %1081 = vmatpush1.bf16.xpose.msra.mxu0 0
        %1082 = vmatprep.subr.bf16.mxu0 0
        %1083 = vmatpush1.bf16.xpose.msra.mxu0 0
        %1084 = vmatprep.mubr.bf16.mxu0 0
        %1085 = vmatmul.mubr.bf16.gmra.mrb[0].mxu0 %v1047
        %v1086 = vpop.f32.mrb[0].mxu0
        %v1087 = vadd.f32 0.0, %v1086
        %v1088 = vpop.f32.mrb[0].mxu0
        %v1089 = vpop.f32.mrb[0].mxu0
        %v1090 = vpop.f32.mrb[0].mxu0
        %1091 = vdwg.mxu0
        %v1092 = vsel %vm713, %v1087, -inf
        %1093 = vmax.xlane.f32.xlu0 %v1092
        %v1094 = vpop.xlane.xlu0 %1093
        %v1095 = vsub.f32 %v1087, %v1094
        %v1096 = vmul.f32 %v1095, 1.442695
        %v1097 = vpow.pop %v1096
        %v1098 = vsel %vm713, %v1097, 0.0
        %1099 = vadd.xlane.f32.xlu0 %v1098
        %v1100 = vpop.xlane.xlu0 %1099
        %v1101 = vpack.c.bf16 %v1097, %v1097
        %1102 = vrot.lane.b32.xlu0 %v712, 104
        %v1103 = vpop.permute.xlu0 %1102
        %v1105 = vsel %vm713, %v1101, 0
        %v1108 = vsel %vm773, %v1103, 0
        %1110 = vmatprep.subr.bf16.mxu0 0
        %1111 = vmatpush1.bf16.msra.mxu0 %v1108
        %1112 = vmatprep.subr.bf16.mxu0 0
        %1113 = vmatpush1.bf16.msra.mxu0 0
        %1114 = vmatprep.subr.bf16.mxu0 0
        %1115 = vmatpush1.bf16.msra.mxu0 0
        %1116 = vmatprep.subr.bf16.mxu0 0
        %1117 = vmatpush1.bf16.msra.mxu0 0
        %1118 = vmatprep.subr.bf16.mxu0 0
        %1119 = vmatpush1.bf16.msra.mxu0 0
        %1120 = vmatprep.subr.bf16.mxu0 0
        %1121 = vmatpush1.bf16.msra.mxu0 0
        %1122 = vmatprep.subr.bf16.mxu0 0
        %1123 = vmatpush1.bf16.msra.mxu0 0
        %1124 = vmatprep.subr.bf16.mxu0 0
        %1125 = vmatpush1.bf16.msra.mxu0 0
        %1126 = vmatprep.subr.bf16.mxu0 0
        %1127 = vmatpush1.bf16.msra.mxu0 0
        %1128 = vmatprep.subr.bf16.mxu0 0
        %1129 = vmatpush1.bf16.msra.mxu0 0
        %1130 = vmatprep.subr.bf16.mxu0 0
        %1131 = vmatpush1.bf16.msra.mxu0 0
        %1132 = vmatprep.subr.bf16.mxu0 0
        %1133 = vmatpush1.bf16.msra.mxu0 0
        %1134 = vmatprep.subr.bf16.mxu0 0
        %1135 = vmatpush1.bf16.msra.mxu0 0
        %1136 = vmatprep.subr.bf16.mxu0 0
        %1137 = vmatpush1.bf16.msra.mxu0 0
        %1138 = vmatprep.subr.bf16.mxu0 0
        %1139 = vmatpush1.bf16.msra.mxu0 0
        %1140 = vmatprep.subr.bf16.mxu0 0
        %1141 = vmatpush1.bf16.msra.mxu0 0
        %1142 = vmatprep.mubr.bf16.mxu0 0
        %1143 = vmatmul.mubr.bf16.gmra.mrb[0].mxu0 %v1105
        %v1144 = vpop.f32.mrb[0].mxu0
        %v1145 = vadd.f32 0.0, %v1144
        %v1146 = vpop.f32.mrb[0].mxu0
        %v1147 = vpop.f32.mrb[0].mxu0
        %v1148 = vpop.f32.mrb[0].mxu0
        %1149 = vdwg.mxu0
        %v1150 = vrcp.pop %v1100
        %v1151 = vmul.f32 %v1145, %v1150
        %1153 = vrot.lane.b32.xlu0 %v931, 8
        %v1154 = vpop.permute.xlu0 %1153
        %1157 = vrot.lane.b32.xlu0 %v1041, 16
        %v1158 = vpop.permute.xlu0 %1157
        %1161 = vrot.lane.b32.xlu0 %v1151, 24
        %v1162 = vpop.permute.xlu0 %1161
        %v1164 = vsel %vm713, %v818, %v1154
        %vm1165 = vcmask 130048
        %v1166 = vsel %vm1165, %v1164, %v1158
        %vm1167 = vcmask 195584
        %v1168 = vsel %vm1167, %v1166, %v1162
        %v1169 = vpack.c.bf16 %v1168, %v1168
        %v1170 = vld [vmem:[#allocation10] sm:$0xf]
        %v1171 = vld [vmem:[#allocation10 + $0x4] sm:$0xf]
        %v1172 = vld [vmem:[#allocation10 + $0x8] sm:$0xf]
        %v1173 = vld [vmem:[#allocation10 + $0xc] sm:$0xf]
        %v1174 = vld [vmem:[%s8] sm:$0x1]
        %v1176 = vlaneseq
        %v1177 = vshrl.u32 %v1176, 7
        %v1178 = vsub.s32 0, %v1177
        %v1179 = vrot.slane %v1174, %v1178
        %v1185 = vunpack.c.l.b16 %v1170
        %v1186 = vunpack.c.l.b16 %v1171
        %v1187 = vunpack.c.l.b16 %v1172
        %v1188 = vunpack.c.l.b16 %v1173
        %v1189 = vpack.c.b16 %v1186, %v1185
        %v1190 = vpack.c.b16 %v1188, %v1187
        %v1194 = vsel %vm540, %v1169, 0
        %1196 = vmatprep.subr.bf16.mxu0 0
        %1197 = vmatpush1.bf16.msra.mxu0 %v1189
        %1198 = vmatprep.subr.bf16.mxu0 0
        %1199 = vmatpush1.bf16.msra.mxu0 %v1190
        %1200 = vmatprep.subr.bf16.mxu0 0
        %1201 = vmatpush1.bf16.msra.mxu0 0
        %1202 = vmatprep.subr.bf16.mxu0 0
        %1203 = vmatpush1.bf16.msra.mxu0 0
        %1204 = vmatprep.subr.bf16.mxu0 0
        %1205 = vmatpush1.bf16.msra.mxu0 0
        %1206 = vmatprep.subr.bf16.mxu0 0
        %1207 = vmatpush1.bf16.msra.mxu0 0
        %1208 = vmatprep.subr.bf16.mxu0 0
        %1209 = vmatpush1.bf16.msra.mxu0 0
        %1210 = vmatprep.subr.bf16.mxu0 0
        %1211 = vmatpush1.bf16.msra.mxu0 0
        %1212 = vmatprep.subr.bf16.mxu0 0
        %1213 = vmatpush1.bf16.msra.mxu0 0
        %1214 = vmatprep.subr.bf16.mxu0 0
        %1215 = vmatpush1.bf16.msra.mxu0 0
        %1216 = vmatprep.subr.bf16.mxu0 0
        %1217 = vmatpush1.bf16.msra.mxu0 0
        %1218 = vmatprep.subr.bf16.mxu0 0
        %1219 = vmatpush1.bf16.msra.mxu0 0
        %1220 = vmatprep.subr.bf16.mxu0 0
        %1221 = vmatpush1.bf16.msra.mxu0 0
        %1222 = vmatprep.subr.bf16.mxu0 0
        %1223 = vmatpush1.bf16.msra.mxu0 0
        %1224 = vmatprep.subr.bf16.mxu0 0
        %1225 = vmatpush1.bf16.msra.mxu0 0
        %1226 = vmatprep.subr.bf16.mxu0 0
        %1227 = vmatpush1.bf16.msra.mxu0 0
        %1228 = vmatprep.mubr.bf16.mxu0 0
        %1229 = vmatmul.mubr.bf16.gmra.mrb[0].mxu0 %v1194
        %v1230 = vpop.f32.mrb[0].mxu0
        %v1231 = vadd.f32 %v1179, %v1230
        %v1232 = vpop.f32.mrb[0].mxu0
        %v1233 = vpop.f32.mrb[0].mxu0
        %v1234 = vpop.f32.mrb[0].mxu0
        %1235 = vdwg.mxu0
        %v1236 = vadd.f32 %v515, %v1231
        %v1237 = vsel %vm540, %v1236, 0.0
        %1238 = vadd.xlane.f32.xlu0 %v1237
        %v1239 = vpop.xlane.xlu0 %1238
        %v1240 = vrcp.pop 32.0
        %v1241 = vmul.f32 %v1239, %v1240
        %v1242 = vsub.f32 %v1236, %v1241
        %v1243 = vmul.f32 %v1242, %v1242
        %v1244 = vsel %vm540, %v1243, 0.0
        %1245 = vadd.xlane.f32.xlu0 %v1244
        %v1246 = vpop.xlane.xlu0 %1245
        %v1247 = vmul.f32 %v1246, %v1240
        %v1248 = vadd.f32 %v1247, 1e-05
        %v1249 = vrsqrt.pop %v1248
        %v1250 = vmul.f32 %v1242, %v1249
        %v1251 = vld [vmem:[%s9] sm:$0x1]
        %v1253 = vlaneseq
        %v1254 = vshrl.u32 %v1253, 7
        %v1255 = vsub.s32 0, %v1254
        %v1256 = vrot.slane %v1251, %v1255
        %v1258 = vmul.f32 %v1250, %v1256
        %v1259 = vld [vmem:[%s10] sm:$0x1]
        %v1261 = vlaneseq
        %v1262 = vshrl.u32 %v1261, 7
        %v1263 = vsub.s32 0, %v1262
        %v1264 = vrot.slane %v1259, %v1263
        %v1266 = vadd.f32 %v1258, %v1264
        %v1267 = vsel %vm540, %v1266, 0.0
        %1268 = vadd.xlane.f32.xlu0 %v1267
        %v1269 = vpop.xlane.xlu0 %1268
        %v1270 = vmul.f32 %v1269, %v1240
        %v1271 = vsub.f32 %v1266, %v1270
        %v1272 = vmul.f32 %v1271, %v1271
        %v1273 = vsel %vm540, %v1272, 0.0
        %1274 = vadd.xlane.f32.xlu0 %v1273
        %v1275 = vpop.xlane.xlu0 %1274
        %v1276 = vmul.f32 %v1275, %v1240
        %v1277 = vadd.f32 %v1276, 1e-05
        %v1278 = vrsqrt.pop %v1277
        %v1279 = vmul.f32 %v1271, %v1278
        %v1280 = vld [vmem:[%s11] sm:$0x1]
        %v1282 = vlaneseq
        %v1283 = vshrl.u32 %v1282, 7
        %v1284 = vsub.s32 0, %v1283
        %v1285 = vrot.slane %v1280, %v1284
        %v1287 = vmul.f32 %v1279, %v1285
        %v1288 = vld [vmem:[%s12] sm:$0x1]
        %v1290 = vlaneseq
        %v1291 = vshrl.u32 %v1290, 7
        %v1292 = vsub.s32 0, %v1291
        %v1293 = vrot.slane %v1288, %v1292
        %v1295 = vadd.f32 %v1287, %v1293
        %1296 = vst.msk [vmem:[%s513] sm:$0xff] %vm540, %v1295
        %s1297 = sand.u32 %s318, 1
        %s1298 = scalar_lea.sflag [#allocation4], %s1297
        %s1299 = sand.u32 %s318, 1
        %s1300 = smul.addr %s1299, 8
        %s1301 = scalar_lea.vmem [#allocation11], %s1300
        // Predicated region
        $region93: #{tpu_custom_call.1} parent=71 // pred_check
          %p1302 = pneg %p328
        $region94: #{tpu_custom_call.1} parent=71 // pred_check_branch
          %1304 = sbr.rel (%p1302) target = $region96
        $region95: #{tpu_custom_call.1} parent=71 // pred_region
          %s1306 = ssub.s32 128, 128
          %1307 = vsyncadd %s1298, %s1306
          %s1308 = smul.addr %s32, 128
          %s1309 = scalar_lea.hbm %s13, %s1308
          %s1311 = sshll.u32 %s1301, 4
          %s1312 = int_to_ptr.vmem [resolvable:$true] %s1311
          %1314 = dma.vmem_to_hbm [thread:$0]  %s1312, 128, %s1309, %s1298
        $region96: #{tpu_custom_call.1} parent=71 // pred_fallthru
          _
      $region72: #{tpu_custom_call.1} parent=5 // pred_fallthru
        _
      %p1315 = scmp.le.s32.totalorder 2, %s27
      // Predicated region
      $region97: #{tpu_custom_call.1} parent=5 // pred_check
        %p1316 = pneg %p1315
      $region98: #{tpu_custom_call.1} parent=5 // pred_check_branch
        %1318 = sbr.rel (%p1316) target = $region100
      $region99: #{tpu_custom_call.1} parent=5 // pred_region
        %s1319 = ssub.s32 %s27, 2
        // Predicated region
        $region101: #{tpu_custom_call.1} parent=99 // pred_check
          %p1320 = pneg %p334
        $region102: #{tpu_custom_call.1} parent=99 // pred_check_branch
          %1322 = sbr.rel (%p1320) target = $region104
        $region103: #{tpu_custom_call.1} parent=99 // pred_region
          %s1323 = sand.u32 %s319, 1
          %s1324 = scalar_lea.sflag [#allocation4], %s1323
          %s1325 = sand.u32 %s319, 1
          %s1326 = smul.addr %s1325, 8
          %s1327 = scalar_lea.vmem [#allocation11], %s1326
          %1328 = dma.done %s1324, 128
        $region104: #{tpu_custom_call.1} parent=99 // pred_fallthru
          _
      $region100: #{tpu_custom_call.1} parent=5 // pred_fallthru
        _
    $region6: #{tpu_custom_call.1} parent=1 // loop_footer
      %s31 = sadd.s32 1, %s27
    $region7: #{tpu_custom_call.1} parent=1 // loop_footer_branch
      %26 = sbr.rel target = $region3
    $region8: #{tpu_custom_call.1} parent=1 // loop_exit
      _
    %1329 = vsyncpa [#allocation3], 1
    %s1330 = scalar_lea.sflag [#allocation3], 1
    %1331 = vsyncpa %s1330, 1
    %1332 = vsyncpa [#allocation6], 1
    %1333 = vsyncpa [#allocation9], 1
    %1334 = vsyncpa [#allocation4], 1
    %s1335 = scalar_lea.sflag [#allocation4], 1
    %1336 = vsyncpa %s1335, 1

</llo_original>
